<compile_context>
chip_gen: v7x
topology: tpu7x:2x2x1
jax: 0.10.0
libtpu: 0.0.40
codegen_flags: <defaults>
</compile_context>

<pallas_src>
import functools

import jax
import jax.numpy as jnp
import numpy as np
from jax.experimental import pallas as pl
from jax.experimental.pallas import tpu as pltpu


def _round_up(x, m):
    return (x + m - 1) // m * m


def conv3d_out_size(size, k, s):
    return tuple((d - kk) // ss + 1 for d, kk, ss in zip(size, k, s))


# ----------------------------- Pallas kernels ------------------------------ #
def _matmul_bias_kernel(x_ref, w_ref, b_ref, o_ref, *, apply_relu):
    """o = relu_opt(x @ w + b).  Single K block: no accumulator needed."""
    y = jnp.dot(x_ref[...], w_ref[...], preferred_element_type=jnp.float32)
    y = y + b_ref[...]
    if apply_relu:
        y = jnp.maximum(y, 0.0)
    o_ref[...] = y.astype(o_ref.dtype)


def _fc_chain_kernel(x_ref, w1_ref, b1_ref, w2_ref, b2_ref, w3_ref, b3_ref, o_ref):
    """Fused fc1+relu -> fc2+relu -> fc3; all operands resident in VMEM."""
    h = jnp.dot(x_ref[...], w1_ref[...], preferred_element_type=jnp.float32) + b1_ref[...]
    h = jnp.maximum(h, 0.0).astype(w2_ref.dtype)
    h = jnp.dot(h, w2_ref[...], preferred_element_type=jnp.float32) + b2_ref[...]
    h = jnp.maximum(h, 0.0).astype(w3_ref.dtype)
    y = jnp.dot(h, w3_ref[...], preferred_element_type=jnp.float32) + b3_ref[...]
    o_ref[...] = y.astype(o_ref.dtype)


# --------------------------- kernel wrappers -------------------------------- #
_TM_CAP = 512  # rows per M tile: keeps per-buffer VMEM small (safe on v7x 64 MiB)
               # while still letting grid[0] > 1 for megacore sharding at large M.


def conv_matmul(x, wp, bp, *, apply_relu, out_dtype=jnp.bfloat16):
    """relu_opt(x @ wp + bp) with a single-K-block tiled Pallas kernel.

    x  : (M, K)  activation (cast to bf16 here; K left unpadded -> full-dim block)
    wp : (K, Np) bf16 weight, Np multiple of 128, pre-padded/folded at prep time
    bp : (1, Np) f32 bias, pre-padded
    Returns (M, Np); caller slices the valid N columns.
    """
    M, K = x.shape
    Kw, Np = wp.shape
    assert K == Kw and Np % 128 == 0

    Mp = _round_up(M, 8)
    if Mp <= _TM_CAP:
        tm = Mp
    else:
        Mp = _round_up(M, _TM_CAP)
        tm = _TM_CAP
    tn = min(Np, 256)

    xp = x.astype(jnp.bfloat16)
    if Mp != M:
        xp = jnp.pad(xp, ((0, Mp - M), (0, 0)))

    out = pl.pallas_call(
        functools.partial(_matmul_bias_kernel, apply_relu=apply_relu),
        out_shape=jax.ShapeDtypeStruct((Mp, Np), out_dtype),
        grid_spec=pltpu.PrefetchScalarGridSpec(
            num_scalar_prefetch=0,
            grid=(Mp // tm, Np // tn),
            in_specs=[
                pl.BlockSpec((tm, K), lambda i, j: (i, 0)),   # whole-K activation tile
                pl.BlockSpec((K, tn), lambda i, j: (0, j)),   # whole-K weight tile
                pl.BlockSpec((1, tn), lambda i, j: (0, j)),   # folded bias
            ],
            out_specs=pl.BlockSpec((tm, tn), lambda i, j: (i, j)),
        ),
        compiler_params=pltpu.CompilerParams(
            dimension_semantics=("parallel", "parallel")),
    )(xp, wp, bp)
    return out[:M, :]


def fc_chain(x, w1p, b1p, w2p, b2p, w3p, b3p):
    """Fused fc1+relu+fc2+relu+fc3 in a single pallas_call (M is tiny)."""
    M, _ = x.shape
    Mp = _round_up(M, 8)
    xp = x.astype(jnp.bfloat16)
    if Mp != M:
        xp = jnp.pad(xp, ((0, Mp - M), (0, 0)))
    Np = w3p.shape[1]

    def _whole(shape):
        return pl.BlockSpec(shape, lambda i: (0, 0))

    out = pl.pallas_call(
        _fc_chain_kernel,
        out_shape=jax.ShapeDtypeStruct((Mp, Np), jnp.float32),
        grid_spec=pltpu.PrefetchScalarGridSpec(
            num_scalar_prefetch=0,
            grid=(1,),
            in_specs=[_whole(a.shape) for a in (xp, w1p, b1p, w2p, b2p, w3p, b3p)],
            out_specs=_whole((Mp, Np)),
        ),
    )(xp, w1p, b1p, w2p, b2p, w3p, b3p)
    return out[:M, :]


# ------------------------------ JAX glue ------------------------------------ #
def im2col_3d_cl(x, ksize, stride):
    """x: (B, D, H, W, C) channels-last ->
       ((B*Do*Ho*Wo, kd*kh*kw*C) with C as the minor K component, (Do, Ho, Wo))."""
    B, D, H, W, C = x.shape
    kd, kh, kw = ksize
    sd, sh, sw = stride
    Do = (D - kd) // sd + 1
    Ho = (H - kh) // sh + 1
    Wo = (W - kw) // sw + 1
    taps = []
    for dz in range(kd):
        for dy in range(kh):
            for dx in range(kw):
                taps.append(x[:, dz:dz + sd * Do:sd,
                              dy:dy + sh * Ho:sh,
                              dx:dx + sw * Wo:sw, :])
    p = jnp.stack(taps, axis=4)                       # (B, Do, Ho, Wo, taps, C)
    return p.reshape(B * Do * Ho * Wo, kd * kh * kw * C), (Do, Ho, Wo)


def init_params(key, t_dim, img_x, img_y, fc_h1, fc_h2, num_classes):
    """PyTorch-shaped parameters (as the nn.Module would hold them)."""
    ch1, ch2 = 32, 48
    k1, k2 = (5, 5, 5), (3, 3, 3)
    s1, s2 = (2, 2, 2), (2, 2, 2)
    o1 = conv3d_out_size((t_dim, img_x, img_y), k1, s1)
    o2 = conv3d_out_size(o1, k2, s2)
    flat = ch2 * o2[0] * o2[1] * o2[2]

    ks = jax.random.split(key, 15)
    return {
        "conv1_w": jax.random.normal(ks[0], (ch1, 1, *k1), jnp.float32) * 0.05,
        "conv1_b": jax.random.normal(ks[1], (ch1,), jnp.float32) * 0.05,
        "bn1_gamma": 0.5 + jax.random.uniform(ks[2], (ch1,), jnp.float32),
        "bn1_beta": jax.random.normal(ks[3], (ch1,), jnp.float32) * 0.1,
        "bn1_mean": jax.random.normal(ks[4], (ch1,), jnp.float32) * 0.1,
        "bn1_var": 0.5 + jax.random.uniform(ks[5], (ch1,), jnp.float32),
        "conv2_w": jax.random.normal(ks[6], (ch2, ch1, *k2), jnp.float32) * 0.05,
        "conv2_b": jax.random.normal(ks[7], (ch2,), jnp.float32) * 0.05,
        "bn2_gamma": 0.5 + jax.random.uniform(ks[8], (ch2,), jnp.float32),
        "bn2_beta": jax.random.normal(ks[9], (ch2,), jnp.float32) * 0.1,
        "bn2_mean": jax.random.normal(ks[10], (ch2,), jnp.float32) * 0.1,
        "bn2_var": 0.5 + jax.random.uniform(ks[11], (ch2,), jnp.float32),
        "fc1_w": jax.random.normal(ks[12], (fc_h1, flat), jnp.float32) * 0.02,
        "fc1_b": jnp.zeros((fc_h1,), jnp.float32),
        "fc2_w": jax.random.normal(ks[13], (fc_h2, fc_h1), jnp.float32) * 0.02,
        "fc2_b": jnp.zeros((fc_h2,), jnp.float32),
        "fc3_w": jax.random.normal(ks[14], (num_classes, fc_h2), jnp.float32) * 0.02,
        "fc3_b": jnp.zeros((num_classes,), jnp.float32),
    }


def prepare_params(params, t_dim, img_x, img_y, fc_h1, fc_h2, num_classes):
    """One-time (outside the hot path) weight prep: BN folding, im2col weight
    flattening (channel-minor K), lane padding to 128, bf16 cast, and fc1
    column permutation to the channels-last flatten order."""
    eps = 1e-5
    ch1, ch2 = 32, 48
    o1 = conv3d_out_size((t_dim, img_x, img_y), (5, 5, 5), (2, 2, 2))
    o2 = conv3d_out_size(o1, (3, 3, 3), (2, 2, 2))
    flat = ch2 * o2[0] * o2[1] * o2[2]

    def conv_pack(conv_w, conv_b, gamma, beta, mean, var):
        c_out = conv_w.shape[0]
        scale = gamma / jnp.sqrt(var + eps)
        bias = beta + (conv_b - mean) * scale
        # (C_out, C_in, kd, kh, kw) -> (kd*kh*kw*C_in, C_out), channel-minor K,
        # with the BN scale folded into the weight columns.
        w = conv_w.transpose(2, 3, 4, 1, 0).reshape(-1, c_out) * scale[None, :]
        n_pad = _round_up(c_out, 128)
        wp = jnp.zeros((w.shape[0], n_pad), jnp.float32).at[:, :c_out].set(w)
        bp = jnp.zeros((1, n_pad), jnp.float32).at[:, :c_out].set(bias[None, :])
        return wp.astype(jnp.bfloat16), bp

    w1p, b1p = conv_pack(params["conv1_w"], params["conv1_b"], params["bn1_gamma"],
                         params["bn1_beta"], params["bn1_mean"], params["bn1_var"])
    w2p, b2p = conv_pack(params["conv2_w"], params["conv2_b"], params["bn2_gamma"],
                         params["bn2_beta"], params["bn2_mean"], params["bn2_var"])

    # fc1: permute input columns from PyTorch's NCDHW flatten (x.view(B, -1))
    # to the channels-last flatten produced by the conv pipeline.
    perm = np.transpose(np.arange(flat).reshape(ch2, *o2), (1, 2, 3, 0)).reshape(-1)
    fc1_w_cl = params["fc1_w"][:, perm].T                       # (flat, fc_h1)

    f1p = _round_up(fc_h1, 128)
    f2p = _round_up(fc_h2, 128)
    ncp = _round_up(num_classes, 128)
    wf1 = jnp.zeros((flat, f1p), jnp.float32).at[:, :fc_h1].set(fc1_w_cl)
    bf1 = jnp.zeros((1, f1p), jnp.float32).at[:, :fc_h1].set(params["fc1_b"][None, :])
    wf2 = jnp.zeros((f1p, f2p), jnp.float32).at[:fc_h1, :fc_h2].set(params["fc2_w"].T)
    bf2 = jnp.zeros((1, f2p), jnp.float32).at[:, :fc_h2].set(params["fc2_b"][None, :])
    wf3 = jnp.zeros((f2p, ncp), jnp.float32).at[:fc_h2, :num_classes].set(params["fc3_w"].T)
    bf3 = jnp.zeros((1, ncp), jnp.float32).at[:, :num_classes].set(params["fc3_b"][None, :])

    return {
        "conv1_w": w1p, "conv1_b": b1p,
        "conv2_w": w2p, "conv2_b": b2p,
        "fc1_w": wf1.astype(jnp.bfloat16), "fc1_b": bf1,
        "fc2_w": wf2.astype(jnp.bfloat16), "fc2_b": bf2,
        "fc3_w": wf3.astype(jnp.bfloat16), "fc3_b": bf3,
    }


def cnn3d_forward(prepared, x_3d, *, num_classes):
    """x_3d: (B, 1, T, H, W) NCDHW (PyTorch layout). Returns (B, num_classes) f32."""
    B = x_3d.shape[0]
    ch1, ch2 = 32, 48

    # Channels-last through the whole conv pipeline (C=1 makes this a cheap relabel).
    x = jnp.transpose(x_3d, (0, 2, 3, 4, 1)).astype(jnp.bfloat16)   # (B, T, H, W, 1)

    # conv1 + folded BN1 + relu   (Dropout3d with p=0 -> identity)
    p1, o1 = im2col_3d_cl(x, (5, 5, 5), (2, 2, 2))
    y1 = conv_matmul(p1, prepared["conv1_w"], prepared["conv1_b"], apply_relu=True)
    y1 = y1[:, :ch1].reshape(B, *o1, ch1)                           # stays channels-last

    # conv2 + folded BN2 + relu
    p2, _ = im2col_3d_cl(y1, (3, 3, 3), (2, 2, 2))
    y2 = conv_matmul(p2, prepared["conv2_w"], prepared["conv2_b"], apply_relu=True)
    # channels-last flatten; fc1 columns were pre-permuted to match this order.
    y2 = y2[:, :ch2].reshape(B, -1)

    # fc1+relu -> fc2+relu -> (dropout p=0 identity) -> fc3, fused into one kernel
    logits = fc_chain(y2, prepared["fc1_w"], prepared["fc1_b"],
                      prepared["fc2_w"], prepared["fc2_b"],
                      prepared["fc3_w"], prepared["fc3_b"])
    # TODO(synk): BatchNorm uses inference-mode running statistics (this is an
    # Inference module); training-mode batch statistics are not implemented.
    return logits[:, :num_classes]


if __name__ == "__main__":
    # Small, self-consistent configuration:
    #   t_dim=13, img_x=13, img_y=13 -> conv1 out (5,5,5) -> conv2 out (2,2,2)
    B, T, H, W = 2, 13, 13, 13
    FC1, FC2, NUM_CLASSES = 64, 32, 4

    key = jax.random.PRNGKey(0)
    pkey, xkey = jax.random.split(key)
    params = init_params(pkey, T, H, W, FC1, FC2, NUM_CLASSES)
    prepared = prepare_params(params, T, H, W, FC1, FC2, NUM_CLASSES)
    x_3d = jax.random.normal(xkey, (B, 1, T, H, W), jnp.float32)

    fwd = jax.jit(functools.partial(cnn3d_forward, num_classes=NUM_CLASSES))
    logits = fwd(prepared, x_3d)
    jax.block_until_ready(logits)
    assert logits.shape == (B, NUM_CLASSES), logits.shape
    assert bool(jnp.all(jnp.isfinite(logits)))
    print("KERNEL_OK")
</pallas_src>

<mosaic_0001>
module attributes {stable_mosaic.version = 11 : i64} {
  func.func @_matmul_bias_kernel(%arg0: i32, %arg1: i32, %arg2: memref<256x125xbf16, #tpu.memory_space<vmem>>, %arg3: memref<125x128xbf16, #tpu.memory_space<vmem>>, %arg4: memref<1x128xf32, #tpu.memory_space<vmem>>, %arg5: memref<256x128xbf16, #tpu.memory_space<vmem>>) attributes {dimension_semantics = [#tpu.dimension_semantics<parallel>, #tpu.dimension_semantics<parallel>], iteration_bounds = array<i64: 1, 1>, scalar_prefetch = 0 : i64, scratch_operands = 0 : i64, tpu.core_type = #tpu.core_type<tc>, window_params = [{transform_indices = @transform_0, window_bounds = array<i64: 256, 125>}, {transform_indices = @transform_1, window_bounds = array<i64: 125, 128>}, {transform_indices = @transform_2, window_bounds = array<i64: 1, 128>}, {transform_indices = @transform_3, window_bounds = array<i64: 256, 128>}]} {
    %c0 = arith.constant 0 : index
    %c0_0 = arith.constant 0 : index
    %0 = vector.load %arg2[%c0, %c0_0] : memref<256x125xbf16, #tpu.memory_space<vmem>>, vector<256x125xbf16>
    %c0_1 = arith.constant 0 : index
    %c0_2 = arith.constant 0 : index
    %1 = vector.load %arg3[%c0_1, %c0_2] : memref<125x128xbf16, #tpu.memory_space<vmem>>, vector<125x128xbf16>
    %cst = arith.constant dense<0.000000e+00> : vector<256x128xf32>
    %2 = tpu.matmul %0, %1, %cst {dimension_numbers = #tpu.dot_dimension_numbers<[1], [0], [0], [1], [0, 0, 1, 1], [], []>} : vector<256x125xbf16>, vector<125x128xbf16>, vector<256x128xf32> -> vector<256x128xf32>
    %c0_3 = arith.constant 0 : index
    %c0_4 = arith.constant 0 : index
    %3 = vector.load %arg4[%c0_3, %c0_4] : memref<1x128xf32, #tpu.memory_space<vmem>>, vector<1x128xf32>
    %4 = vector.broadcast %3 : vector<1x128xf32> to vector<256x128xf32>
    %5 = arith.addf %2, %4 : vector<256x128xf32>
    %cst_5 = arith.constant 0.000000e+00 : f32
    %6 = vector.broadcast %cst_5 : f32 to vector<256x128xf32>
    %7 = arith.maximumf %5, %6 : vector<256x128xf32>
    %8 = arith.truncf %7 : vector<256x128xf32> to vector<256x128xbf16>
    %c0_6 = arith.constant 0 : index
    %c0_7 = arith.constant 0 : index
    %9 = vector.load %arg5[%c0_6, %c0_7] : memref<256x128xbf16, #tpu.memory_space<vmem>>, vector<256x128xbf16>
    tpu.vector_store %arg5[%c0_6, %c0_7], %8 {strides = array<i32>} : memref<256x128xbf16, #tpu.memory_space<vmem>>, vector<256x128xbf16>,
    return
  }
  func.func @transform_0(%arg0: i32, %arg1: i32) -> (i32, i32) {
    %c0_i32 = arith.constant 0 : i32
    %c0_i32_0 = arith.constant 0 : i32
    return %arg0, %c0_i32 : i32, i32
  }
  func.func @transform_1(%arg0: i32, %arg1: i32) -> (i32, i32) {
    %c0_i32 = arith.constant 0 : i32
    %c0_i32_0 = arith.constant 0 : i32
    return %c0_i32, %arg1 : i32, i32
  }
  func.func @transform_2(%arg0: i32, %arg1: i32) -> (i32, i32) {
    %c0_i32 = arith.constant 0 : i32
    %c0_i32_0 = arith.constant 0 : i32
    return %c0_i32, %arg1 : i32, i32
  }
  func.func @transform_3(%arg0: i32, %arg1: i32) -> (i32, i32) {
    %c0_i32 = arith.constant 0 : i32
    return %arg0, %arg1 : i32, i32
  }
}

module attributes {stable_mosaic.version = 11 : i64} {
  func.func @_matmul_bias_kernel(%arg0: i32, %arg1: i32, %arg2: memref<16x864xbf16, #tpu.memory_space<vmem>>, %arg3: memref<864x128xbf16, #tpu.memory_space<vmem>>, %arg4: memref<1x128xf32, #tpu.memory_space<vmem>>, %arg5: memref<16x128xbf16, #tpu.memory_space<vmem>>) attributes {dimension_semantics = [#tpu.dimension_semantics<parallel>, #tpu.dimension_semantics<parallel>], iteration_bounds = array<i64: 1, 1>, scalar_prefetch = 0 : i64, scratch_operands = 0 : i64, tpu.core_type = #tpu.core_type<tc>, window_params = [{transform_indices = @transform_0, window_bounds = array<i64: 16, 864>}, {transform_indices = @transform_1, window_bounds = array<i64: 864, 128>}, {transform_indices = @transform_2, window_bounds = array<i64: 1, 128>}, {transform_indices = @transform_3, window_bounds = array<i64: 16, 128>}]} {
    %c0 = arith.constant 0 : index
    %c0_0 = arith.constant 0 : index
    %0 = vector.load %arg2[%c0, %c0_0] : memref<16x864xbf16, #tpu.memory_space<vmem>>, vector<16x864xbf16>
    %c0_1 = arith.constant 0 : index
    %c0_2 = arith.constant 0 : index
    %1 = vector.load %arg3[%c0_1, %c0_2] : memref<864x128xbf16, #tpu.memory_space<vmem>>, vector<864x128xbf16>
    %cst = arith.constant dense<0.000000e+00> : vector<16x128xf32>
    %2 = tpu.matmul %0, %1, %cst {dimension_numbers = #tpu.dot_dimension_numbers<[1], [0], [0], [1], [0, 0, 1, 1], [], []>} : vector<16x864xbf16>, vector<864x128xbf16>, vector<16x128xf32> -> vector<16x128xf32>
    %c0_3 = arith.constant 0 : index
    %c0_4 = arith.constant 0 : index
    %3 = vector.load %arg4[%c0_3, %c0_4] : memref<1x128xf32, #tpu.memory_space<vmem>>, vector<1x128xf32>
    %4 = vector.broadcast %3 : vector<1x128xf32> to vector<16x128xf32>
    %5 = arith.addf %2, %4 : vector<16x128xf32>
    %cst_5 = arith.constant 0.000000e+00 : f32
    %6 = vector.broadcast %cst_5 : f32 to vector<16x128xf32>
    %7 = arith.maximumf %5, %6 : vector<16x128xf32>
    %8 = arith.truncf %7 : vector<16x128xf32> to vector<16x128xbf16>
    %c0_6 = arith.constant 0 : index
    %c0_7 = arith.constant 0 : index
    %9 = vector.load %arg5[%c0_6, %c0_7] : memref<16x128xbf16, #tpu.memory_space<vmem>>, vector<16x128xbf16>
    tpu.vector_store %arg5[%c0_6, %c0_7], %8 {strides = array<i32>} : memref<16x128xbf16, #tpu.memory_space<vmem>>, vector<16x128xbf16>,
    return
  }
  func.func @transform_0(%arg0: i32, %arg1: i32) -> (i32, i32) {
    %c0_i32 = arith.constant 0 : i32
    %c0_i32_0 = arith.constant 0 : i32
    return %arg0, %c0_i32 : i32, i32
  }
  func.func @transform_1(%arg0: i32, %arg1: i32) -> (i32, i32) {
    %c0_i32 = arith.constant 0 : i32
    %c0_i32_0 = arith.constant 0 : i32
    return %c0_i32, %arg1 : i32, i32
  }
  func.func @transform_2(%arg0: i32, %arg1: i32) -> (i32, i32) {
    %c0_i32 = arith.constant 0 : i32
    %c0_i32_0 = arith.constant 0 : i32
    return %c0_i32, %arg1 : i32, i32
  }
  func.func @transform_3(%arg0: i32, %arg1: i32) -> (i32, i32) {
    %c0_i32 = arith.constant 0 : i32
    return %arg0, %arg1 : i32, i32
  }
}

module attributes {stable_mosaic.version = 11 : i64} {
  func.func @_fc_chain_kernel(%arg0: i32, %arg1: memref<8x384xbf16, #tpu.memory_space<vmem>>, %arg2: memref<384x128xbf16, #tpu.memory_space<vmem>>, %arg3: memref<1x128xf32, #tpu.memory_space<vmem>>, %arg4: memref<128x128xbf16, #tpu.memory_space<vmem>>, %arg5: memref<1x128xf32, #tpu.memory_space<vmem>>, %arg6: memref<128x128xbf16, #tpu.memory_space<vmem>>, %arg7: memref<1x128xf32, #tpu.memory_space<vmem>>, %arg8: memref<8x128xf32, #tpu.memory_space<vmem>>) attributes {dimension_semantics = [#tpu.dimension_semantics<arbitrary>], iteration_bounds = array<i64: 1>, scalar_prefetch = 0 : i64, scratch_operands = 0 : i64, tpu.core_type = #tpu.core_type<tc>, window_params = [{pipeline_mode = #tpu.pipeline_mode<synchronous>, transform_indices = @transform_0, window_bounds = array<i64: 8, 384>}, {pipeline_mode = #tpu.pipeline_mode<synchronous>, transform_indices = @transform_1, window_bounds = array<i64: 384, 128>}, {pipeline_mode = #tpu.pipeline_mode<synchronous>, transform_indices = @transform_2, window_bounds = array<i64: 1, 128>}, {pipeline_mode = #tpu.pipeline_mode<synchronous>, transform_indices = @transform_3, window_bounds = array<i64: 128, 128>}, {pipeline_mode = #tpu.pipeline_mode<synchronous>, transform_indices = @transform_4, window_bounds = array<i64: 1, 128>}, {pipeline_mode = #tpu.pipeline_mode<synchronous>, transform_indices = @transform_5, window_bounds = array<i64: 128, 128>}, {pipeline_mode = #tpu.pipeline_mode<synchronous>, transform_indices = @transform_6, window_bounds = array<i64: 1, 128>}, {pipeline_mode = #tpu.pipeline_mode<synchronous>, transform_indices = @transform_7, window_bounds = array<i64: 8, 128>}]} {
    %c0 = arith.constant 0 : index
    %c0_0 = arith.constant 0 : index
    %0 = vector.load %arg1[%c0, %c0_0] : memref<8x384xbf16, #tpu.memory_space<vmem>>, vector<8x384xbf16>
    %c0_1 = arith.constant 0 : index
    %c0_2 = arith.constant 0 : index
    %1 = vector.load %arg2[%c0_1, %c0_2] : memref<384x128xbf16, #tpu.memory_space<vmem>>, vector<384x128xbf16>
    %cst = arith.constant dense<0.000000e+00> : vector<8x128xf32>
    %2 = tpu.matmul %0, %1, %cst {dimension_numbers = #tpu.dot_dimension_numbers<[1], [0], [0], [1], [0, 0, 1, 1], [], []>} : vector<8x384xbf16>, vector<384x128xbf16>, vector<8x128xf32> -> vector<8x128xf32>
    %c0_3 = arith.constant 0 : index
    %c0_4 = arith.constant 0 : index
    %3 = vector.load %arg3[%c0_3, %c0_4] : memref<1x128xf32, #tpu.memory_space<vmem>>, vector<1x128xf32>
    %4 = vector.broadcast %3 : vector<1x128xf32> to vector<8x128xf32>
    %5 = arith.addf %2, %4 : vector<8x128xf32>
    %cst_5 = arith.constant 0.000000e+00 : f32
    %6 = vector.broadcast %cst_5 : f32 to vector<8x128xf32>
    %7 = arith.maximumf %5, %6 : vector<8x128xf32>
    %8 = arith.truncf %7 : vector<8x128xf32> to vector<8x128xbf16>
    %c0_6 = arith.constant 0 : index
    %c0_7 = arith.constant 0 : index
    %9 = vector.load %arg4[%c0_6, %c0_7] : memref<128x128xbf16, #tpu.memory_space<vmem>>, vector<128x128xbf16>
    %cst_8 = arith.constant dense<0.000000e+00> : vector<8x128xf32>
    %10 = tpu.matmul %8, %9, %cst_8 {dimension_numbers = #tpu.dot_dimension_numbers<[1], [0], [0], [1], [0, 0, 1, 1], [], []>} : vector<8x128xbf16>, vector<128x128xbf16>, vector<8x128xf32> -> vector<8x128xf32>
    %c0_9 = arith.constant 0 : index
    %c0_10 = arith.constant 0 : index
    %11 = vector.load %arg5[%c0_9, %c0_10] : memref<1x128xf32, #tpu.memory_space<vmem>>, vector<1x128xf32>
    %12 = vector.broadcast %11 : vector<1x128xf32> to vector<8x128xf32>
    %13 = arith.addf %10, %12 : vector<8x128xf32>
    %cst_11 = arith.constant 0.000000e+00 : f32
    %14 = vector.broadcast %cst_11 : f32 to vector<8x128xf32>
    %15 = arith.maximumf %13, %14 : vector<8x128xf32>
    %16 = arith.truncf %15 : vector<8x128xf32> to vector<8x128xbf16>
    %c0_12 = arith.constant 0 : index
    %c0_13 = arith.constant 0 : index
    %17 = vector.load %arg6[%c0_12, %c0_13] : memref<128x128xbf16, #tpu.memory_space<vmem>>, vector<128x128xbf16>
    %cst_14 = arith.constant dense<0.000000e+00> : vector<8x128xf32>
    %18 = tpu.matmul %16, %17, %cst_14 {dimension_numbers = #tpu.dot_dimension_numbers<[1], [0], [0], [1], [0, 0, 1, 1], [], []>} : vector<8x128xbf16>, vector<128x128xbf16>, vector<8x128xf32> -> vector<8x128xf32>
    %c0_15 = arith.constant 0 : index
    %c0_16 = arith.constant 0 : index
    %19 = vector.load %arg7[%c0_15, %c0_16] : memref<1x128xf32, #tpu.memory_space<vmem>>, vector<1x128xf32>
    %20 = vector.broadcast %19 : vector<1x128xf32> to vector<8x128xf32>
    %21 = arith.addf %18, %20 : vector<8x128xf32>
    %c0_17 = arith.constant 0 : index
    %c0_18 = arith.constant 0 : index
    %22 = vector.load %arg8[%c0_17, %c0_18] : memref<8x128xf32, #tpu.memory_space<vmem>>, vector<8x128xf32>
    tpu.vector_store %arg8[%c0_17, %c0_18], %21 {strides = array<i32>} : memref<8x128xf32, #tpu.memory_space<vmem>>, vector<8x128xf32>,
    return
  }
  func.func @transform_0(%arg0: i32) -> (i32, i32) {
    %c0_i32 = arith.constant 0 : i32
    %c0_i32_0 = arith.constant 0 : i32
    %c0_i32_1 = arith.constant 0 : i32
    return %c0_i32, %c0_i32_0 : i32, i32
  }
  func.func @transform_1(%arg0: i32) -> (i32, i32) {
    %c0_i32 = arith.constant 0 : i32
    %c0_i32_0 = arith.constant 0 : i32
    %c0_i32_1 = arith.constant 0 : i32
    return %c0_i32, %c0_i32_0 : i32, i32
  }
  func.func @transform_2(%arg0: i32) -> (i32, i32) {
    %c0_i32 = arith.constant 0 : i32
    %c0_i32_0 = arith.constant 0 : i32
    %c0_i32_1 = arith.constant 0 : i32
    return %c0_i32, %c0_i32_0 : i32, i32
  }
  func.func @transform_3(%arg0: i32) -> (i32, i32) {
    %c0_i32 = arith.constant 0 : i32
    %c0_i32_0 = arith.constant 0 : i32
    %c0_i32_1 = arith.constant 0 : i32
    return %c0_i32, %c0_i32_0 : i32, i32
  }
  func.func @transform_4(%arg0: i32) -> (i32, i32) {
    %c0_i32 = arith.constant 0 : i32
    %c0_i32_0 = arith.constant 0 : i32
    %c0_i32_1 = arith.constant 0 : i32
    return %c0_i32, %c0_i32_0 : i32, i32
  }
  func.func @transform_5(%arg0: i32) -> (i32, i32) {
    %c0_i32 = arith.constant 0 : i32
    %c0_i32_0 = arith.constant 0 : i32
    %c0_i32_1 = arith.constant 0 : i32
    return %c0_i32, %c0_i32_0 : i32, i32
  }
  func.func @transform_6(%arg0: i32) -> (i32, i32) {
    %c0_i32 = arith.constant 0 : i32
    %c0_i32_0 = arith.constant 0 : i32
    %c0_i32_1 = arith.constant 0 : i32
    return %c0_i32, %c0_i32_0 : i32, i32
  }
  func.func @transform_7(%arg0: i32) -> (i32, i32) {
    %c0_i32 = arith.constant 0 : i32
    %c0_i32_0 = arith.constant 0 : i32
    %c0_i32_1 = arith.constant 0 : i32
    return %c0_i32, %c0_i32_0 : i32, i32
  }
}

</mosaic_0001>

<llo_original>
// kernel: cnn3d_forward.3
$region0: #{cnn3d_forward.3}
  #allocation0 [shape = 'u32[]', space=smem, size = 0x4, offset = 0x4, fixed_abs, tag = 'smem constant byte address 0x4 - core index']
  #allocation1 [shape = 'u32[144,128]{1,0:T(1,128)}', space=vmem, size = 0x12000, scoped, tag = 'internal scratch']
  %s0 = inlined_call_operand.vmem [shape: bf16[256,125], index: 0, kind: input, shape index: {}]
  %s1 = inlined_call_operand.vmem [shape: bf16[125,128], index: 1, kind: input, shape index: {}]
  %s2 = inlined_call_operand.vmem [shape: f32[1,128], index: 2, kind: input, shape index: {}]
  %s3 = inlined_call_operand.vmem [shape: bf16[256,128], index: 3, kind: output, shape index: {}]
  %s4 = sld [smem:[#allocation0]]
  $region22: #{cnn3d_forward.3} parent=0
    _
  %s6 = ssub.s32 1, %s4
  %s7 = scalar_select 0, %s6, %s4
  // Predicated region
  $region2: #{cnn3d_forward.3} parent=0 // pred_check
    _
  $region3: #{cnn3d_forward.3} parent=0 // pred_check_branch
    %9 = sbr.rel (0) target = $region5
  $region4: #{cnn3d_forward.3} parent=0 // pred_region
    _
  $region5: #{cnn3d_forward.3} parent=0 // pred_fallthru
    _
  // Predicated region
  $region6: #{cnn3d_forward.3} parent=0 // pred_check
    _
  $region7: #{cnn3d_forward.3} parent=0 // pred_check_branch
    %11 = sbr.rel (0) target = $region9
  $region8: #{cnn3d_forward.3} parent=0 // pred_region
    _
  $region9: #{cnn3d_forward.3} parent=0 // pred_fallthru
    _
  // Predicated region
  $region10: #{cnn3d_forward.3} parent=0 // pred_check
    _
  $region11: #{cnn3d_forward.3} parent=0 // pred_check_branch
    %13 = sbr.rel (0) target = $region13
  $region12: #{cnn3d_forward.3} parent=0 // pred_region
    _
  $region13: #{cnn3d_forward.3} parent=0 // pred_fallthru
    _
  %v15 = vld [vmem:[%s0] sm:$0xf]
  %v16 = vld [vmem:[%s0 + $0x4] sm:$0xf]
  %v17 = vld [vmem:[%s0 + $0x8] sm:$0xf]
  %v18 = vld [vmem:[%s0 + $0xc] sm:$0xf]
  %v19 = vld [vmem:[%s0 + $0x10] sm:$0xf]
  %v20 = vld [vmem:[%s0 + $0x14] sm:$0xf]
  %v21 = vld [vmem:[%s0 + $0x18] sm:$0xf]
  %v22 = vld [vmem:[%s0 + $0x1c] sm:$0xf]
  %v23 = vld [vmem:[%s0 + $0x20] sm:$0xf]
  %v24 = vld [vmem:[%s0 + $0x24] sm:$0xf]
  %v25 = vld [vmem:[%s0 + $0x28] sm:$0xf]
  %v26 = vld [vmem:[%s0 + $0x2c] sm:$0xf]
  %v27 = vld [vmem:[%s0 + $0x30] sm:$0xf]
  %v28 = vld [vmem:[%s0 + $0x34] sm:$0xf]
  %v29 = vld [vmem:[%s0 + $0x38] sm:$0xf]
  %v30 = vld [vmem:[%s0 + $0x3c] sm:$0xf]
  %v31 = vld [vmem:[%s0 + $0x40] sm:$0xf]
  %v32 = vld [vmem:[%s0 + $0x44] sm:$0xf]
  %v33 = vld [vmem:[%s0 + $0x48] sm:$0xf]
  %v34 = vld [vmem:[%s0 + $0x4c] sm:$0xf]
  %v35 = vld [vmem:[%s0 + $0x50] sm:$0xf]
  %v36 = vld [vmem:[%s0 + $0x54] sm:$0xf]
  %v37 = vld [vmem:[%s0 + $0x58] sm:$0xf]
  %v38 = vld [vmem:[%s0 + $0x5c] sm:$0xf]
  %v39 = vld [vmem:[%s0 + $0x60] sm:$0xf]
  %v40 = vld [vmem:[%s0 + $0x64] sm:$0xf]
  %v41 = vld [vmem:[%s0 + $0x68] sm:$0xf]
  %v42 = vld [vmem:[%s0 + $0x6c] sm:$0xf]
  %v43 = vld [vmem:[%s0 + $0x70] sm:$0xf]
  %v44 = vld [vmem:[%s0 + $0x74] sm:$0xf]
  %v45 = vld [vmem:[%s0 + $0x78] sm:$0xf]
  %v46 = vld [vmem:[%s0 + $0x7c] sm:$0xf]
  %v47 = vld [vmem:[%s1] sm:$0xf]
  %v48 = vld [vmem:[%s1 + $0x4] sm:$0xf]
  %v49 = vld [vmem:[%s1 + $0x8] sm:$0xf]
  %v50 = vld [vmem:[%s1 + $0xc] sm:$0xf]
  %v51 = vld [vmem:[%s1 + $0x10] sm:$0xf]
  %v52 = vld [vmem:[%s1 + $0x14] sm:$0xf]
  %v53 = vld [vmem:[%s1 + $0x18] sm:$0xf]
  %v54 = vld [vmem:[%s1 + $0x1c] sm:$0xf]
  %v55 = vld [vmem:[%s1 + $0x20] sm:$0xf]
  %v56 = vld [vmem:[%s1 + $0x24] sm:$0xf]
  %v57 = vld [vmem:[%s1 + $0x28] sm:$0xf]
  %v58 = vld [vmem:[%s1 + $0x2c] sm:$0xf]
  %v59 = vld [vmem:[%s1 + $0x30] sm:$0xf]
  %v60 = vld [vmem:[%s1 + $0x34] sm:$0xf]
  %v61 = vld [vmem:[%s1 + $0x38] sm:$0xf]
  %v62 = vld [vmem:[%s1 + $0x3c] sm:$0x7]
  %v63 = vld [vmem:[%s2] sm:$0x1]
  %v65 = vlaneseq
  %v66 = vshrl.u32 %v65, 7
  %v67 = vsub.s32 0, %v66
  %v68 = vrot.slane %v63, %v67
  %v102 = vunpack.c.l.b16 %v15
  %v103 = vunpack.c.l.b16 %v16
  %v104 = vunpack.c.l.b16 %v17
  %v105 = vunpack.c.l.b16 %v18
  %v106 = vunpack.c.l.b16 %v19
  %v107 = vunpack.c.l.b16 %v20
  %v108 = vunpack.c.l.b16 %v21
  %v109 = vunpack.c.l.b16 %v22
  %v110 = vunpack.c.l.b16 %v23
  %v111 = vunpack.c.l.b16 %v24
  %v112 = vunpack.c.l.b16 %v25
  %v113 = vunpack.c.l.b16 %v26
  %v114 = vunpack.c.l.b16 %v27
  %v115 = vunpack.c.l.b16 %v28
  %v116 = vunpack.c.l.b16 %v29
  %v117 = vunpack.c.l.b16 %v30
  %v118 = vunpack.c.l.b16 %v31
  %v119 = vunpack.c.l.b16 %v32
  %v120 = vunpack.c.l.b16 %v33
  %v121 = vunpack.c.l.b16 %v34
  %v122 = vunpack.c.l.b16 %v35
  %v123 = vunpack.c.l.b16 %v36
  %v124 = vunpack.c.l.b16 %v37
  %v125 = vunpack.c.l.b16 %v38
  %v126 = vunpack.c.l.b16 %v39
  %v127 = vunpack.c.l.b16 %v40
  %v128 = vunpack.c.l.b16 %v41
  %v129 = vunpack.c.l.b16 %v42
  %v130 = vunpack.c.l.b16 %v43
  %v131 = vunpack.c.l.b16 %v44
  %v132 = vunpack.c.l.b16 %v45
  %v133 = vunpack.c.l.b16 %v46
  %v134 = vpack.c.b16 %v103, %v102
  %v135 = vpack.c.b16 %v105, %v104
  %v136 = vpack.c.b16 %v107, %v106
  %v137 = vpack.c.b16 %v109, %v108
  %v138 = vpack.c.b16 %v111, %v110
  %v139 = vpack.c.b16 %v113, %v112
  %v140 = vpack.c.b16 %v115, %v114
  %v141 = vpack.c.b16 %v117, %v116
  %v142 = vpack.c.b16 %v119, %v118
  %v143 = vpack.c.b16 %v121, %v120
  %v144 = vpack.c.b16 %v123, %v122
  %v145 = vpack.c.b16 %v125, %v124
  %v146 = vpack.c.b16 %v127, %v126
  %v147 = vpack.c.b16 %v129, %v128
  %v148 = vpack.c.b16 %v131, %v130
  %v149 = vpack.c.b16 %v133, %v132
  %v166 = vunpack.c.l.b16 %v47
  %v167 = vunpack.c.l.b16 %v48
  %v168 = vunpack.c.l.b16 %v49
  %v169 = vunpack.c.l.b16 %v50
  %v170 = vunpack.c.l.b16 %v51
  %v171 = vunpack.c.l.b16 %v52
  %v172 = vunpack.c.l.b16 %v53
  %v173 = vunpack.c.l.b16 %v54
  %v174 = vunpack.c.l.b16 %v55
  %v175 = vunpack.c.l.b16 %v56
  %v176 = vunpack.c.l.b16 %v57
  %v177 = vunpack.c.l.b16 %v58
  %v178 = vunpack.c.l.b16 %v59
  %v179 = vunpack.c.l.b16 %v60
  %v180 = vunpack.c.l.b16 %v61
  %v181 = vunpack.c.l.b16 %v62
  %v182 = vpack.c.b16 %v167, %v166
  %v183 = vpack.c.b16 %v169, %v168
  %v184 = vpack.c.b16 %v171, %v170
  %v185 = vpack.c.b16 %v173, %v172
  %v186 = vpack.c.b16 %v175, %v174
  %v187 = vpack.c.b16 %v177, %v176
  %v188 = vpack.c.b16 %v179, %v178
  %v189 = vpack.c.b16 %v181, %v180
  %vm197 = vcmask 1022976
  %v199 = vsel %vm197, %v134, 0
  %v202 = vsel %vm197, %v135, 0
  %v205 = vsel %vm197, %v136, 0
  %v208 = vsel %vm197, %v137, 0
  %v211 = vsel %vm197, %v138, 0
  %v214 = vsel %vm197, %v139, 0
  %v217 = vsel %vm197, %v140, 0
  %v220 = vsel %vm197, %v141, 0
  %v223 = vsel %vm197, %v142, 0
  %v226 = vsel %vm197, %v143, 0
  %v229 = vsel %vm197, %v144, 0
  %v232 = vsel %vm197, %v145, 0
  %v235 = vsel %vm197, %v146, 0
  %v238 = vsel %vm197, %v147, 0
  %v241 = vsel %vm197, %v148, 0
  %v244 = vsel %vm197, %v149, 0
  %vm246 = vcmask 1045504
  %vm247 = vcmask 1046528
  %v248 = vsel %vm246, 4294967295, 65535
  %v249 = vsel %vm247, %v248, 0
  %v251 = vand.u32 %v189, %v249
  %253 = vmatprep.subr.bf16.mxu0 0
  %254 = vmatpush1.bf16.msra.mxu0 %v182
  %255 = vmatprep.subr.bf16.mxu0 0
  %256 = vmatpush1.bf16.msra.mxu0 %v183
  %257 = vmatprep.subr.bf16.mxu0 0
  %258 = vmatpush1.bf16.msra.mxu0 %v184
  %259 = vmatprep.subr.bf16.mxu0 0
  %260 = vmatpush1.bf16.msra.mxu0 %v185
  %261 = vmatprep.subr.bf16.mxu0 0
  %262 = vmatpush1.bf16.msra.mxu0 %v186
  %263 = vmatprep.subr.bf16.mxu0 0
  %264 = vmatpush1.bf16.msra.mxu0 %v187
  %265 = vmatprep.subr.bf16.mxu0 0
  %266 = vmatpush1.bf16.msra.mxu0 %v188
  %267 = vmatprep.subr.bf16.mxu0 0
  %268 = vmatpush1.bf16.msra.mxu0 %v251
  %269 = vmatprep.subr.bf16.mxu0 0
  %270 = vmatpush1.bf16.msra.mxu0 0
  %271 = vmatprep.subr.bf16.mxu0 0
  %272 = vmatpush1.bf16.msra.mxu0 0
  %273 = vmatprep.subr.bf16.mxu0 0
  %274 = vmatpush1.bf16.msra.mxu0 0
  %275 = vmatprep.subr.bf16.mxu0 0
  %276 = vmatpush1.bf16.msra.mxu0 0
  %277 = vmatprep.subr.bf16.mxu0 0
  %278 = vmatpush1.bf16.msra.mxu0 0
  %279 = vmatprep.subr.bf16.mxu0 0
  %280 = vmatpush1.bf16.msra.mxu0 0
  %281 = vmatprep.subr.bf16.mxu0 0
  %282 = vmatpush1.bf16.msra.mxu0 0
  %283 = vmatprep.subr.bf16.mxu0 0
  %284 = vmatpush1.bf16.msra.mxu0 0
  %285 = vmatprep.mubr.bf16.mxu0 0
  %286 = vmatmul.mubr.bf16.gmra.mrb[0].mxu0 %v199
  %v287 = vpop.f32.mrb[0].mxu0
  %v288 = vadd.f32 %v68, %v287
  %v289 = vpop.f32.mrb[0].mxu0
  %v290 = vpop.f32.mrb[0].mxu0
  %v291 = vadd.f32 %v68, %v290
  %v292 = vpop.f32.mrb[0].mxu0
  %293 = vmatprep.mubr.bf16.mxu0 0
  %294 = vmatmul.mubr.bf16.gmra.mrb[0].mxu0 %v202
  %v295 = vpop.f32.mrb[0].mxu0
  %v296 = vadd.f32 %v68, %v295
  %v297 = vpop.f32.mrb[0].mxu0
  %v298 = vpop.f32.mrb[0].mxu0
  %v299 = vadd.f32 %v68, %v298
  %v300 = vpop.f32.mrb[0].mxu0
  %301 = vmatprep.mubr.bf16.mxu0 0
  %302 = vmatmul.mubr.bf16.gmra.mrb[0].mxu0 %v205
  %v303 = vpop.f32.mrb[0].mxu0
  %v304 = vadd.f32 %v68, %v303
  %v305 = vpop.f32.mrb[0].mxu0
  %v306 = vpop.f32.mrb[0].mxu0
  %v307 = vadd.f32 %v68, %v306
  %v308 = vpop.f32.mrb[0].mxu0
  %309 = vmatprep.mubr.bf16.mxu0 0
  %310 = vmatmul.mubr.bf16.gmra.mrb[0].mxu0 %v208
  %v311 = vpop.f32.mrb[0].mxu0
  %v312 = vadd.f32 %v68, %v311
  %v313 = vpop.f32.mrb[0].mxu0
  %v314 = vpop.f32.mrb[0].mxu0
  %v315 = vadd.f32 %v68, %v314
  %v316 = vpop.f32.mrb[0].mxu0
  %317 = vmatprep.mubr.bf16.mxu0 0
  %318 = vmatmul.mubr.bf16.gmra.mrb[0].mxu0 %v211
  %v319 = vpop.f32.mrb[0].mxu0
  %v320 = vadd.f32 %v68, %v319
  %v321 = vpop.f32.mrb[0].mxu0
  %v322 = vpop.f32.mrb[0].mxu0
  %v323 = vadd.f32 %v68, %v322
  %v324 = vpop.f32.mrb[0].mxu0
  %325 = vmatprep.mubr.bf16.mxu0 0
  %326 = vmatmul.mubr.bf16.gmra.mrb[0].mxu0 %v214
  %v327 = vpop.f32.mrb[0].mxu0
  %v328 = vadd.f32 %v68, %v327
  %v329 = vpop.f32.mrb[0].mxu0
  %v330 = vpop.f32.mrb[0].mxu0
  %v331 = vadd.f32 %v68, %v330
  %v332 = vpop.f32.mrb[0].mxu0
  %333 = vmatprep.mubr.bf16.mxu0 0
  %334 = vmatmul.mubr.bf16.gmra.mrb[0].mxu0 %v217
  %v335 = vpop.f32.mrb[0].mxu0
  %v336 = vadd.f32 %v68, %v335
  %v337 = vpop.f32.mrb[0].mxu0
  %v338 = vpop.f32.mrb[0].mxu0
  %v339 = vadd.f32 %v68, %v338
  %v340 = vpop.f32.mrb[0].mxu0
  %341 = vmatprep.mubr.bf16.mxu0 0
  %342 = vmatmul.mubr.bf16.gmra.mrb[0].mxu0 %v220
  %v343 = vpop.f32.mrb[0].mxu0
  %v344 = vadd.f32 %v68, %v343
  %v345 = vpop.f32.mrb[0].mxu0
  %v346 = vpop.f32.mrb[0].mxu0
  %v347 = vadd.f32 %v68, %v346
  %v348 = vpop.f32.mrb[0].mxu0
  %349 = vmatprep.mubr.bf16.mxu0 0
  %350 = vmatmul.mubr.bf16.gmra.mrb[0].mxu0 %v223
  %v351 = vpop.f32.mrb[0].mxu0
  %v352 = vadd.f32 %v68, %v351
  %v353 = vpop.f32.mrb[0].mxu0
  %v354 = vpop.f32.mrb[0].mxu0
  %v355 = vadd.f32 %v68, %v354
  %v356 = vpop.f32.mrb[0].mxu0
  %357 = vmatprep.mubr.bf16.mxu0 0
  %358 = vmatmul.mubr.bf16.gmra.mrb[0].mxu0 %v226
  %v359 = vpop.f32.mrb[0].mxu0
  %v360 = vadd.f32 %v68, %v359
  %v361 = vpop.f32.mrb[0].mxu0
  %v362 = vpop.f32.mrb[0].mxu0
  %v363 = vadd.f32 %v68, %v362
  %v364 = vpop.f32.mrb[0].mxu0
  %365 = vmatprep.mubr.bf16.mxu0 0
  %366 = vmatmul.mubr.bf16.gmra.mrb[0].mxu0 %v229
  %v367 = vpop.f32.mrb[0].mxu0
  %v368 = vadd.f32 %v68, %v367
  %v369 = vpop.f32.mrb[0].mxu0
  %v370 = vpop.f32.mrb[0].mxu0
  %v371 = vadd.f32 %v68, %v370
  %v372 = vpop.f32.mrb[0].mxu0
  %373 = vmatprep.mubr.bf16.mxu0 0
  %374 = vmatmul.mubr.bf16.gmra.mrb[0].mxu0 %v232
  %v375 = vpop.f32.mrb[0].mxu0
  %v376 = vadd.f32 %v68, %v375
  %v377 = vpop.f32.mrb[0].mxu0
  %v378 = vpop.f32.mrb[0].mxu0
  %v379 = vadd.f32 %v68, %v378
  %v380 = vpop.f32.mrb[0].mxu0
  %381 = vmatprep.mubr.bf16.mxu0 0
  %382 = vmatmul.mubr.bf16.gmra.mrb[0].mxu0 %v235
  %v383 = vpop.f32.mrb[0].mxu0
  %v384 = vadd.f32 %v68, %v383
  %v385 = vpop.f32.mrb[0].mxu0
  %v386 = vpop.f32.mrb[0].mxu0
  %v387 = vadd.f32 %v68, %v386
  %v388 = vpop.f32.mrb[0].mxu0
  %389 = vmatprep.mubr.bf16.mxu0 0
  %390 = vmatmul.mubr.bf16.gmra.mrb[0].mxu0 %v238
  %v391 = vpop.f32.mrb[0].mxu0
  %v392 = vadd.f32 %v68, %v391
  %v393 = vpop.f32.mrb[0].mxu0
  %v394 = vpop.f32.mrb[0].mxu0
  %v395 = vadd.f32 %v68, %v394
  %v396 = vpop.f32.mrb[0].mxu0
  %397 = vmatprep.mubr.bf16.mxu0 0
  %398 = vmatmul.mubr.bf16.gmra.mrb[0].mxu0 %v241
  %v399 = vpop.f32.mrb[0].mxu0
  %v400 = vadd.f32 %v68, %v399
  %v401 = vpop.f32.mrb[0].mxu0
  %v402 = vpop.f32.mrb[0].mxu0
  %v403 = vadd.f32 %v68, %v402
  %v404 = vpop.f32.mrb[0].mxu0
  %405 = vmatprep.mubr.bf16.mxu0 0
  %406 = vmatmul.mubr.bf16.gmra.mrb[0].mxu0 %v244
  %v407 = vpop.f32.mrb[0].mxu0
  %v408 = vadd.f32 %v68, %v407
  %v409 = vpop.f32.mrb[0].mxu0
  %v410 = vpop.f32.mrb[0].mxu0
  %v411 = vadd.f32 %v68, %v410
  %v412 = vpop.f32.mrb[0].mxu0
  %413 = vdwg.mxu0
  %v414 = vmax.f32 %v288, 0.0
  %v415 = vmax.f32 %v291, 0.0
  %v416 = vmax.f32 %v296, 0.0
  %v417 = vmax.f32 %v299, 0.0
  %v418 = vmax.f32 %v304, 0.0
  %v419 = vmax.f32 %v307, 0.0
  %v420 = vmax.f32 %v312, 0.0
  %v421 = vmax.f32 %v315, 0.0
  %v422 = vmax.f32 %v320, 0.0
  %v423 = vmax.f32 %v323, 0.0
  %v424 = vmax.f32 %v328, 0.0
  %v425 = vmax.f32 %v331, 0.0
  %v426 = vmax.f32 %v336, 0.0
  %v427 = vmax.f32 %v339, 0.0
  %v428 = vmax.f32 %v344, 0.0
  %v429 = vmax.f32 %v347, 0.0
  %v430 = vmax.f32 %v352, 0.0
  %v431 = vmax.f32 %v355, 0.0
  %v432 = vmax.f32 %v360, 0.0
  %v433 = vmax.f32 %v363, 0.0
  %v434 = vmax.f32 %v368, 0.0
  %v435 = vmax.f32 %v371, 0.0
  %v436 = vmax.f32 %v376, 0.0
  %v437 = vmax.f32 %v379, 0.0
  %v438 = vmax.f32 %v384, 0.0
  %v439 = vmax.f32 %v387, 0.0
  %v440 = vmax.f32 %v392, 0.0
  %v441 = vmax.f32 %v395, 0.0
  %v442 = vmax.f32 %v400, 0.0
  %v443 = vmax.f32 %v403, 0.0
  %v444 = vmax.f32 %v408, 0.0
  %v445 = vmax.f32 %v411, 0.0
  %v446 = vpack.c.bf16 %v415, %v414
  %v447 = vpack.c.bf16 %v417, %v416
  %v448 = vpack.c.bf16 %v419, %v418
  %v449 = vpack.c.bf16 %v421, %v420
  %v450 = vpack.c.bf16 %v423, %v422
  %v451 = vpack.c.bf16 %v425, %v424
  %v452 = vpack.c.bf16 %v427, %v426
  %v453 = vpack.c.bf16 %v429, %v428
  %v454 = vpack.c.bf16 %v431, %v430
  %v455 = vpack.c.bf16 %v433, %v432
  %v456 = vpack.c.bf16 %v435, %v434
  %v457 = vpack.c.bf16 %v437, %v436
  %v458 = vpack.c.bf16 %v439, %v438
  %v459 = vpack.c.bf16 %v441, %v440
  %v460 = vpack.c.bf16 %v443, %v442
  %v461 = vpack.c.bf16 %v445, %v444
  %v478 = vunpack.c.l.b16 %v446
  %v479 = vunpack.c.h.b16 %v446
  %v480 = vunpack.c.l.b16 %v447
  %v481 = vunpack.c.h.b16 %v447
  %v482 = vunpack.c.l.b16 %v448
  %v483 = vunpack.c.h.b16 %v448
  %v484 = vunpack.c.l.b16 %v449
  %v485 = vunpack.c.h.b16 %v449
  %v486 = vunpack.c.l.b16 %v450
  %v487 = vunpack.c.h.b16 %v450
  %v488 = vunpack.c.l.b16 %v451
  %v489 = vunpack.c.h.b16 %v451
  %v490 = vunpack.c.l.b16 %v452
  %v491 = vunpack.c.h.b16 %v452
  %v492 = vunpack.c.l.b16 %v453
  %v493 = vunpack.c.h.b16 %v453
  %v494 = vunpack.c.l.b16 %v454
  %v495 = vunpack.c.h.b16 %v454
  %v496 = vunpack.c.l.b16 %v455
  %v497 = vunpack.c.h.b16 %v455
  %v498 = vunpack.c.l.b16 %v456
  %v499 = vunpack.c.h.b16 %v456
  %v500 = vunpack.c.l.b16 %v457
  %v501 = vunpack.c.h.b16 %v457
  %v502 = vunpack.c.l.b16 %v458
  %v503 = vunpack.c.h.b16 %v458
  %v504 = vunpack.c.l.b16 %v459
  %v505 = vunpack.c.h.b16 %v459
  %v506 = vunpack.c.l.b16 %v460
  %v507 = vunpack.c.h.b16 %v460
  %v508 = vunpack.c.l.b16 %v461
  %v509 = vunpack.c.h.b16 %v461
  %v510 = vpack.c.b16 %v478, %v478
  %v511 = vpack.c.b16 %v479, %v479
  %v512 = vpack.c.b16 %v480, %v480
  %v513 = vpack.c.b16 %v481, %v481
  %v514 = vpack.c.b16 %v482, %v482
  %v515 = vpack.c.b16 %v483, %v483
  %v516 = vpack.c.b16 %v484, %v484
  %v517 = vpack.c.b16 %v485, %v485
  %v518 = vpack.c.b16 %v486, %v486
  %v519 = vpack.c.b16 %v487, %v487
  %v520 = vpack.c.b16 %v488, %v488
  %v521 = vpack.c.b16 %v489, %v489
  %v522 = vpack.c.b16 %v490, %v490
  %v523 = vpack.c.b16 %v491, %v491
  %v524 = vpack.c.b16 %v492, %v492
  %v525 = vpack.c.b16 %v493, %v493
  %v526 = vpack.c.b16 %v494, %v494
  %v527 = vpack.c.b16 %v495, %v495
  %v528 = vpack.c.b16 %v496, %v496
  %v529 = vpack.c.b16 %v497, %v497
  %v530 = vpack.c.b16 %v498, %v498
  %v531 = vpack.c.b16 %v499, %v499
  %v532 = vpack.c.b16 %v500, %v500
  %v533 = vpack.c.b16 %v501, %v501
  %v534 = vpack.c.b16 %v502, %v502
  %v535 = vpack.c.b16 %v503, %v503
  %v536 = vpack.c.b16 %v504, %v504
  %v537 = vpack.c.b16 %v505, %v505
  %v538 = vpack.c.b16 %v506, %v506
  %v539 = vpack.c.b16 %v507, %v507
  %v540 = vpack.c.b16 %v508, %v508
  %v541 = vpack.c.b16 %v509, %v509
  %574 = vst [vmem:[%s3] sm:$0xf] %v510
  %575 = vst [vmem:[%s3 + $0x4] sm:$0xf] %v511
  %576 = vst [vmem:[%s3 + $0x8] sm:$0xf] %v512
  %577 = vst [vmem:[%s3 + $0xc] sm:$0xf] %v513
  %578 = vst [vmem:[%s3 + $0x10] sm:$0xf] %v514
  %579 = vst [vmem:[%s3 + $0x14] sm:$0xf] %v515
  %580 = vst [vmem:[%s3 + $0x18] sm:$0xf] %v516
  %581 = vst [vmem:[%s3 + $0x1c] sm:$0xf] %v517
  %582 = vst [vmem:[%s3 + $0x20] sm:$0xf] %v518
  %583 = vst [vmem:[%s3 + $0x24] sm:$0xf] %v519
  %584 = vst [vmem:[%s3 + $0x28] sm:$0xf] %v520
  %585 = vst [vmem:[%s3 + $0x2c] sm:$0xf] %v521
  %586 = vst [vmem:[%s3 + $0x30] sm:$0xf] %v522
  %587 = vst [vmem:[%s3 + $0x34] sm:$0xf] %v523
  %588 = vst [vmem:[%s3 + $0x38] sm:$0xf] %v524
  %589 = vst [vmem:[%s3 + $0x3c] sm:$0xf] %v525
  %590 = vst [vmem:[%s3 + $0x40] sm:$0xf] %v526
  %591 = vst [vmem:[%s3 + $0x44] sm:$0xf] %v527
  %592 = vst [vmem:[%s3 + $0x48] sm:$0xf] %v528
  %593 = vst [vmem:[%s3 + $0x4c] sm:$0xf] %v529
  %594 = vst [vmem:[%s3 + $0x50] sm:$0xf] %v530
  %595 = vst [vmem:[%s3 + $0x54] sm:$0xf] %v531
  %596 = vst [vmem:[%s3 + $0x58] sm:$0xf] %v532
  %597 = vst [vmem:[%s3 + $0x5c] sm:$0xf] %v533
  %598 = vst [vmem:[%s3 + $0x60] sm:$0xf] %v534
  %599 = vst [vmem:[%s3 + $0x64] sm:$0xf] %v535
  %600 = vst [vmem:[%s3 + $0x68] sm:$0xf] %v536
  %601 = vst [vmem:[%s3 + $0x6c] sm:$0xf] %v537
  %602 = vst [vmem:[%s3 + $0x70] sm:$0xf] %v538
  %603 = vst [vmem:[%s3 + $0x74] sm:$0xf] %v539
  %604 = vst [vmem:[%s3 + $0x78] sm:$0xf] %v540
  %605 = vst [vmem:[%s3 + $0x7c] sm:$0xf] %v541
  // Predicated region
  $region14: #{cnn3d_forward.3} parent=0 // pred_check
    _
  $region15: #{cnn3d_forward.3} parent=0 // pred_check_branch
    %607 = sbr.rel (0) target = $region17
  $region16: #{cnn3d_forward.3} parent=0 // pred_region
    _
  $region17: #{cnn3d_forward.3} parent=0 // pred_fallthru
    _
  // Predicated region
  $region18: #{cnn3d_forward.3} parent=0 // pred_check
    _
  $region19: #{cnn3d_forward.3} parent=0 // pred_check_branch
    %609 = sbr.rel (0) target = $region21
  $region20: #{cnn3d_forward.3} parent=0 // pred_region
    _
  $region21: #{cnn3d_forward.3} parent=0 // pred_fallthru
    _

// kernel: cnn3d_forward.5
$region0: #{cnn3d_forward.5}
  #allocation0 [shape = 'u32[]', space=smem, size = 0x4, offset = 0x4, fixed_abs, tag = 'smem constant byte address 0x4 - core index']
  #allocation1 [shape = 'u32[144,128]{1,0:T(1,128)}', space=vmem, size = 0x12000, scoped, tag = 'internal scratch']
  %s0 = inlined_call_operand.vmem [shape: bf16[8,384], index: 0, kind: input, shape index: {}]
  %s1 = inlined_call_operand.vmem [shape: bf16[384,128], index: 1, kind: input, shape index: {}]
  %s2 = inlined_call_operand.vmem [shape: f32[1,128], index: 2, kind: input, shape index: {}]
  %s3 = inlined_call_operand.vmem [shape: bf16[128,128], index: 3, kind: input, shape index: {}]
  %s4 = inlined_call_operand.vmem [shape: f32[1,128], index: 4, kind: input, shape index: {}]
  %s5 = inlined_call_operand.vmem [shape: bf16[128,128], index: 5, kind: input, shape index: {}]
  %s6 = inlined_call_operand.vmem [shape: f32[1,128], index: 6, kind: input, shape index: {}]
  %s7 = inlined_call_operand.vmem [shape: f32[8,128], index: 7, kind: output, shape index: {}]
  %s8 = sld [smem:[#allocation0]]
  $region38: #{cnn3d_forward.5} parent=0
    _
  %s10 = ssub.s32 1, %s8
  %s11 = scalar_select 0, %s10, %s8
  // Predicated region
  $region2: #{cnn3d_forward.5} parent=0 // pred_check
    _
  $region3: #{cnn3d_forward.5} parent=0 // pred_check_branch
    %13 = sbr.rel (0) target = $region5
  $region4: #{cnn3d_forward.5} parent=0 // pred_region
    _
  $region5: #{cnn3d_forward.5} parent=0 // pred_fallthru
    _
  // Predicated region
  $region6: #{cnn3d_forward.5} parent=0 // pred_check
    _
  $region7: #{cnn3d_forward.5} parent=0 // pred_check_branch
    %15 = sbr.rel (0) target = $region9
  $region8: #{cnn3d_forward.5} parent=0 // pred_region
    _
  $region9: #{cnn3d_forward.5} parent=0 // pred_fallthru
    _
  // Predicated region
  $region10: #{cnn3d_forward.5} parent=0 // pred_check
    _
  $region11: #{cnn3d_forward.5} parent=0 // pred_check_branch
    %17 = sbr.rel (0) target = $region13
  $region12: #{cnn3d_forward.5} parent=0 // pred_region
    _
  $region13: #{cnn3d_forward.5} parent=0 // pred_fallthru
    _
  // Predicated region
  $region14: #{cnn3d_forward.5} parent=0 // pred_check
    _
  $region15: #{cnn3d_forward.5} parent=0 // pred_check_branch
    %19 = sbr.rel (0) target = $region17
  $region16: #{cnn3d_forward.5} parent=0 // pred_region
    _
  $region17: #{cnn3d_forward.5} parent=0 // pred_fallthru
    _
  // Predicated region
  $region18: #{cnn3d_forward.5} parent=0 // pred_check
    _
  $region19: #{cnn3d_forward.5} parent=0 // pred_check_branch
    %21 = sbr.rel (0) target = $region21
  $region20: #{cnn3d_forward.5} parent=0 // pred_region
    _
  $region21: #{cnn3d_forward.5} parent=0 // pred_fallthru
    _
  // Predicated region
  $region22: #{cnn3d_forward.5} parent=0 // pred_check
    _
  $region23: #{cnn3d_forward.5} parent=0 // pred_check_branch
    %23 = sbr.rel (0) target = $region25
  $region24: #{cnn3d_forward.5} parent=0 // pred_region
    _
  $region25: #{cnn3d_forward.5} parent=0 // pred_fallthru
    _
  // Predicated region
  $region26: #{cnn3d_forward.5} parent=0 // pred_check
    _
  $region27: #{cnn3d_forward.5} parent=0 // pred_check_branch
    %25 = sbr.rel (0) target = $region29
  $region28: #{cnn3d_forward.5} parent=0 // pred_region
    _
  $region29: #{cnn3d_forward.5} parent=0 // pred_fallthru
    _
  %v27 = vld [vmem:[%s0] sm:$0xff]
  %v28 = vld [vmem:[%s0 + $0x8] sm:$0xf]
  %v29 = vld [vmem:[%s1] sm:$0xf]
  %v30 = vld [vmem:[%s1 + $0x4] sm:$0xf]
  %v31 = vld [vmem:[%s1 + $0x8] sm:$0xf]
  %v32 = vld [vmem:[%s1 + $0xc] sm:$0xf]
  %v33 = vld [vmem:[%s1 + $0x10] sm:$0xf]
  %v34 = vld [vmem:[%s1 + $0x14] sm:$0xf]
  %v35 = vld [vmem:[%s1 + $0x18] sm:$0xf]
  %v36 = vld [vmem:[%s1 + $0x1c] sm:$0xf]
  %v37 = vld [vmem:[%s1 + $0x20] sm:$0xf]
  %v38 = vld [vmem:[%s1 + $0x24] sm:$0xf]
  %v39 = vld [vmem:[%s1 + $0x28] sm:$0xf]
  %v40 = vld [vmem:[%s1 + $0x2c] sm:$0xf]
  %v41 = vld [vmem:[%s1 + $0x30] sm:$0xf]
  %v42 = vld [vmem:[%s1 + $0x34] sm:$0xf]
  %v43 = vld [vmem:[%s1 + $0x38] sm:$0xf]
  %v44 = vld [vmem:[%s1 + $0x3c] sm:$0xf]
  %v45 = vld [vmem:[%s1 + $0x40] sm:$0xf]
  %v46 = vld [vmem:[%s1 + $0x44] sm:$0xf]
  %v47 = vld [vmem:[%s1 + $0x48] sm:$0xf]
  %v48 = vld [vmem:[%s1 + $0x4c] sm:$0xf]
  %v49 = vld [vmem:[%s1 + $0x50] sm:$0xf]
  %v50 = vld [vmem:[%s1 + $0x54] sm:$0xf]
  %v51 = vld [vmem:[%s1 + $0x58] sm:$0xf]
  %v52 = vld [vmem:[%s1 + $0x5c] sm:$0xf]
  %v53 = vld [vmem:[%s1 + $0x60] sm:$0xf]
  %v54 = vld [vmem:[%s1 + $0x64] sm:$0xf]
  %v55 = vld [vmem:[%s1 + $0x68] sm:$0xf]
  %v56 = vld [vmem:[%s1 + $0x6c] sm:$0xf]
  %v57 = vld [vmem:[%s1 + $0x70] sm:$0xf]
  %v58 = vld [vmem:[%s1 + $0x74] sm:$0xf]
  %v59 = vld [vmem:[%s1 + $0x78] sm:$0xf]
  %v60 = vld [vmem:[%s1 + $0x7c] sm:$0xf]
  %v61 = vld [vmem:[%s1 + $0x80] sm:$0xf]
  %v62 = vld [vmem:[%s1 + $0x84] sm:$0xf]
  %v63 = vld [vmem:[%s1 + $0x88] sm:$0xf]
  %v64 = vld [vmem:[%s1 + $0x8c] sm:$0xf]
  %v65 = vld [vmem:[%s1 + $0x90] sm:$0xf]
  %v66 = vld [vmem:[%s1 + $0x94] sm:$0xf]
  %v67 = vld [vmem:[%s1 + $0x98] sm:$0xf]
  %v68 = vld [vmem:[%s1 + $0x9c] sm:$0xf]
  %v69 = vld [vmem:[%s1 + $0xa0] sm:$0xf]
  %v70 = vld [vmem:[%s1 + $0xa4] sm:$0xf]
  %v71 = vld [vmem:[%s1 + $0xa8] sm:$0xf]
  %v72 = vld [vmem:[%s1 + $0xac] sm:$0xf]
  %v73 = vld [vmem:[%s1 + $0xb0] sm:$0xf]
  %v74 = vld [vmem:[%s1 + $0xb4] sm:$0xf]
  %v75 = vld [vmem:[%s1 + $0xb8] sm:$0xf]
  %v76 = vld [vmem:[%s1 + $0xbc] sm:$0xf]
  %v77 = vld [vmem:[%s2] sm:$0x1]
  %v79 = vlaneseq
  %v80 = vshrl.u32 %v79, 7
  %v81 = vsub.s32 0, %v80
  %v82 = vrot.slane %v77, %v81
  %v86 = vunpack.c.l.b16 %v27
  %v87 = vunpack.c.h.b16 %v27
  %v88 = vunpack.c.l.b16 %v28
  %v89 = vpack.c.b16 %v86, %v86
  %v90 = vpack.c.b16 %v87, %v87
  %v91 = vpack.c.b16 %v88, %v88
  %v143 = vunpack.c.l.b16 %v29
  %v144 = vunpack.c.l.b16 %v30
  %v145 = vunpack.c.l.b16 %v31
  %v146 = vunpack.c.l.b16 %v32
  %v147 = vunpack.c.l.b16 %v33
  %v148 = vunpack.c.l.b16 %v34
  %v149 = vunpack.c.l.b16 %v35
  %v150 = vunpack.c.l.b16 %v36
  %v151 = vunpack.c.l.b16 %v37
  %v152 = vunpack.c.l.b16 %v38
  %v153 = vunpack.c.l.b16 %v39
  %v154 = vunpack.c.l.b16 %v40
  %v155 = vunpack.c.l.b16 %v41
  %v156 = vunpack.c.l.b16 %v42
  %v157 = vunpack.c.l.b16 %v43
  %v158 = vunpack.c.l.b16 %v44
  %v159 = vunpack.c.l.b16 %v45
  %v160 = vunpack.c.l.b16 %v46
  %v161 = vunpack.c.l.b16 %v47
  %v162 = vunpack.c.l.b16 %v48
  %v163 = vunpack.c.l.b16 %v49
  %v164 = vunpack.c.l.b16 %v50
  %v165 = vunpack.c.l.b16 %v51
  %v166 = vunpack.c.l.b16 %v52
  %v167 = vunpack.c.l.b16 %v53
  %v168 = vunpack.c.l.b16 %v54
  %v169 = vunpack.c.l.b16 %v55
  %v170 = vunpack.c.l.b16 %v56
  %v171 = vunpack.c.l.b16 %v57
  %v172 = vunpack.c.l.b16 %v58
  %v173 = vunpack.c.l.b16 %v59
  %v174 = vunpack.c.l.b16 %v60
  %v175 = vunpack.c.l.b16 %v61
  %v176 = vunpack.c.l.b16 %v62
  %v177 = vunpack.c.l.b16 %v63
  %v178 = vunpack.c.l.b16 %v64
  %v179 = vunpack.c.l.b16 %v65
  %v180 = vunpack.c.l.b16 %v66
  %v181 = vunpack.c.l.b16 %v67
  %v182 = vunpack.c.l.b16 %v68
  %v183 = vunpack.c.l.b16 %v69
  %v184 = vunpack.c.l.b16 %v70
  %v185 = vunpack.c.l.b16 %v71
  %v186 = vunpack.c.l.b16 %v72
  %v187 = vunpack.c.l.b16 %v73
  %v188 = vunpack.c.l.b16 %v74
  %v189 = vunpack.c.l.b16 %v75
  %v190 = vunpack.c.l.b16 %v76
  %v191 = vpack.c.b16 %v144, %v143
  %v192 = vpack.c.b16 %v146, %v145
  %v193 = vpack.c.b16 %v148, %v147
  %v194 = vpack.c.b16 %v150, %v149
  %v195 = vpack.c.b16 %v152, %v151
  %v196 = vpack.c.b16 %v154, %v153
  %v197 = vpack.c.b16 %v156, %v155
  %v198 = vpack.c.b16 %v158, %v157
  %v199 = vpack.c.b16 %v160, %v159
  %v200 = vpack.c.b16 %v162, %v161
  %v201 = vpack.c.b16 %v164, %v163
  %v202 = vpack.c.b16 %v166, %v165
  %v203 = vpack.c.b16 %v168, %v167
  %v204 = vpack.c.b16 %v170, %v169
  %v205 = vpack.c.b16 %v172, %v171
  %v206 = vpack.c.b16 %v174, %v173
  %v207 = vpack.c.b16 %v176, %v175
  %v208 = vpack.c.b16 %v178, %v177
  %v209 = vpack.c.b16 %v180, %v179
  %v210 = vpack.c.b16 %v182, %v181
  %v211 = vpack.c.b16 %v184, %v183
  %v212 = vpack.c.b16 %v186, %v185
  %v213 = vpack.c.b16 %v188, %v187
  %v214 = vpack.c.b16 %v190, %v189
  %239 = vmatprep.subr.bf16.mxu0 0
  %240 = vmatpush1.bf16.msra.mxu0 %v191
  %241 = vmatprep.subr.bf16.mxu0 0
  %242 = vmatpush1.bf16.msra.mxu0 %v192
  %243 = vmatprep.subr.bf16.mxu0 0
  %244 = vmatpush1.bf16.msra.mxu0 %v193
  %245 = vmatprep.subr.bf16.mxu0 0
  %246 = vmatpush1.bf16.msra.mxu0 %v194
  %247 = vmatprep.subr.bf16.mxu0 0
  %248 = vmatpush1.bf16.msra.mxu0 %v195
  %249 = vmatprep.subr.bf16.mxu0 0
  %250 = vmatpush1.bf16.msra.mxu0 %v196
  %251 = vmatprep.subr.bf16.mxu0 0
  %252 = vmatpush1.bf16.msra.mxu0 %v197
  %253 = vmatprep.subr.bf16.mxu0 0
  %254 = vmatpush1.bf16.msra.mxu0 %v198
  %255 = vmatprep.subr.bf16.mxu0 0
  %256 = vmatpush1.bf16.msra.mxu0 %v199
  %257 = vmatprep.subr.bf16.mxu0 0
  %258 = vmatpush1.bf16.msra.mxu0 %v200
  %259 = vmatprep.subr.bf16.mxu0 0
  %260 = vmatpush1.bf16.msra.mxu0 %v201
  %261 = vmatprep.subr.bf16.mxu0 0
  %262 = vmatpush1.bf16.msra.mxu0 %v202
  %263 = vmatprep.subr.bf16.mxu0 0
  %264 = vmatpush1.bf16.msra.mxu0 %v203
  %265 = vmatprep.subr.bf16.mxu0 0
  %266 = vmatpush1.bf16.msra.mxu0 %v204
  %267 = vmatprep.subr.bf16.mxu0 0
  %268 = vmatpush1.bf16.msra.mxu0 %v205
  %269 = vmatprep.subr.bf16.mxu0 0
  %270 = vmatpush1.bf16.msra.mxu0 %v206
  %271 = vmatprep.mubr.bf16.mxu0 %v90
  %272 = vmatmul.mubr.bf16.gmra.mrb[0].mxu0 %v89
  %v273 = vpop.f32.mrb[0].mxu0
  %v274 = vadd.f32 %v82, %v273
  %v275 = vpop.f32.mrb[0].mxu0
  %v276 = vpop.f32.mrb[0].mxu0
  %v277 = vpop.f32.mrb[0].mxu0
  %278 = vdwg.mxu0
  %279 = vmatprep.subr.bf16.mxu0 0
  %280 = vmatpush1.bf16.msra.mxu0 %v207
  %281 = vmatprep.subr.bf16.mxu0 0
  %282 = vmatpush1.bf16.msra.mxu0 %v208
  %283 = vmatprep.subr.bf16.mxu0 0
  %284 = vmatpush1.bf16.msra.mxu0 %v209
  %285 = vmatprep.subr.bf16.mxu0 0
  %286 = vmatpush1.bf16.msra.mxu0 %v210
  %287 = vmatprep.subr.bf16.mxu0 0
  %288 = vmatpush1.bf16.msra.mxu0 %v211
  %289 = vmatprep.subr.bf16.mxu0 0
  %290 = vmatpush1.bf16.msra.mxu0 %v212
  %291 = vmatprep.subr.bf16.mxu0 0
  %292 = vmatpush1.bf16.msra.mxu0 %v213
  %293 = vmatprep.subr.bf16.mxu0 0
  %294 = vmatpush1.bf16.msra.mxu0 %v214
  %295 = vmatprep.subr.bf16.mxu0 0
  %296 = vmatpush1.bf16.msra.mxu0 0
  %297 = vmatprep.subr.bf16.mxu0 0
  %298 = vmatpush1.bf16.msra.mxu0 0
  %299 = vmatprep.subr.bf16.mxu0 0
  %300 = vmatpush1.bf16.msra.mxu0 0
  %301 = vmatprep.subr.bf16.mxu0 0
  %302 = vmatpush1.bf16.msra.mxu0 0
  %303 = vmatprep.subr.bf16.mxu0 0
  %304 = vmatpush1.bf16.msra.mxu0 0
  %305 = vmatprep.subr.bf16.mxu0 0
  %306 = vmatpush1.bf16.msra.mxu0 0
  %307 = vmatprep.subr.bf16.mxu0 0
  %308 = vmatpush1.bf16.msra.mxu0 0
  %309 = vmatprep.subr.bf16.mxu0 0
  %310 = vmatpush1.bf16.msra.mxu0 0
  %311 = vmatprep.mubr.bf16.mxu0 0
  %312 = vmatmul.mubr.bf16.gmra.mrb[0].mxu0 %v91
  %v313 = vpop.f32.mrb[0].mxu0
  %v314 = vadd.f32 %v274, %v313
  %v315 = vpop.f32.mrb[0].mxu0
  %v316 = vpop.f32.mrb[0].mxu0
  %v317 = vpop.f32.mrb[0].mxu0
  %318 = vdwg.mxu0
  %v319 = vmax.f32 %v314, 0.0
  %v320 = vpack.c.bf16 %v319, %v319
  %v321 = vld [vmem:[%s3] sm:$0xf]
  %v322 = vld [vmem:[%s3 + $0x4] sm:$0xf]
  %v323 = vld [vmem:[%s3 + $0x8] sm:$0xf]
  %v324 = vld [vmem:[%s3 + $0xc] sm:$0xf]
  %v325 = vld [vmem:[%s3 + $0x10] sm:$0xf]
  %v326 = vld [vmem:[%s3 + $0x14] sm:$0xf]
  %v327 = vld [vmem:[%s3 + $0x18] sm:$0xf]
  %v328 = vld [vmem:[%s3 + $0x1c] sm:$0xf]
  %v329 = vld [vmem:[%s3 + $0x20] sm:$0xf]
  %v330 = vld [vmem:[%s3 + $0x24] sm:$0xf]
  %v331 = vld [vmem:[%s3 + $0x28] sm:$0xf]
  %v332 = vld [vmem:[%s3 + $0x2c] sm:$0xf]
  %v333 = vld [vmem:[%s3 + $0x30] sm:$0xf]
  %v334 = vld [vmem:[%s3 + $0x34] sm:$0xf]
  %v335 = vld [vmem:[%s3 + $0x38] sm:$0xf]
  %v336 = vld [vmem:[%s3 + $0x3c] sm:$0xf]
  %v337 = vld [vmem:[%s4] sm:$0x1]
  %v339 = vlaneseq
  %v340 = vshrl.u32 %v339, 7
  %v341 = vsub.s32 0, %v340
  %v342 = vrot.slane %v337, %v341
  %v360 = vunpack.c.l.b16 %v321
  %v361 = vunpack.c.l.b16 %v322
  %v362 = vunpack.c.l.b16 %v323
  %v363 = vunpack.c.l.b16 %v324
  %v364 = vunpack.c.l.b16 %v325
  %v365 = vunpack.c.l.b16 %v326
  %v366 = vunpack.c.l.b16 %v327
  %v367 = vunpack.c.l.b16 %v328
  %v368 = vunpack.c.l.b16 %v329
  %v369 = vunpack.c.l.b16 %v330
  %v370 = vunpack.c.l.b16 %v331
  %v371 = vunpack.c.l.b16 %v332
  %v372 = vunpack.c.l.b16 %v333
  %v373 = vunpack.c.l.b16 %v334
  %v374 = vunpack.c.l.b16 %v335
  %v375 = vunpack.c.l.b16 %v336
  %v376 = vpack.c.b16 %v361, %v360
  %v377 = vpack.c.b16 %v363, %v362
  %v378 = vpack.c.b16 %v365, %v364
  %v379 = vpack.c.b16 %v367, %v366
  %v380 = vpack.c.b16 %v369, %v368
  %v381 = vpack.c.b16 %v371, %v370
  %v382 = vpack.c.b16 %v373, %v372
  %v383 = vpack.c.b16 %v375, %v374
  %392 = vmatprep.subr.bf16.mxu0 0
  %393 = vmatpush1.bf16.msra.mxu0 %v376
  %394 = vmatprep.subr.bf16.mxu0 0
  %395 = vmatpush1.bf16.msra.mxu0 %v377
  %396 = vmatprep.subr.bf16.mxu0 0
  %397 = vmatpush1.bf16.msra.mxu0 %v378
  %398 = vmatprep.subr.bf16.mxu0 0
  %399 = vmatpush1.bf16.msra.mxu0 %v379
  %400 = vmatprep.subr.bf16.mxu0 0
  %401 = vmatpush1.bf16.msra.mxu0 %v380
  %402 = vmatprep.subr.bf16.mxu0 0
  %403 = vmatpush1.bf16.msra.mxu0 %v381
  %404 = vmatprep.subr.bf16.mxu0 0
  %405 = vmatpush1.bf16.msra.mxu0 %v382
  %406 = vmatprep.subr.bf16.mxu0 0
  %407 = vmatpush1.bf16.msra.mxu0 %v383
  %408 = vmatprep.subr.bf16.mxu0 0
  %409 = vmatpush1.bf16.msra.mxu0 0
  %410 = vmatprep.subr.bf16.mxu0 0
  %411 = vmatpush1.bf16.msra.mxu0 0
  %412 = vmatprep.subr.bf16.mxu0 0
  %413 = vmatpush1.bf16.msra.mxu0 0
  %414 = vmatprep.subr.bf16.mxu0 0
  %415 = vmatpush1.bf16.msra.mxu0 0
  %416 = vmatprep.subr.bf16.mxu0 0
  %417 = vmatpush1.bf16.msra.mxu0 0
  %418 = vmatprep.subr.bf16.mxu0 0
  %419 = vmatpush1.bf16.msra.mxu0 0
  %420 = vmatprep.subr.bf16.mxu0 0
  %421 = vmatpush1.bf16.msra.mxu0 0
  %422 = vmatprep.subr.bf16.mxu0 0
  %423 = vmatpush1.bf16.msra.mxu0 0
  %424 = vmatprep.mubr.bf16.mxu0 0
  %425 = vmatmul.mubr.bf16.gmra.mrb[0].mxu0 %v320
  %v426 = vpop.f32.mrb[0].mxu0
  %v427 = vadd.f32 %v342, %v426
  %v428 = vpop.f32.mrb[0].mxu0
  %v429 = vpop.f32.mrb[0].mxu0
  %v430 = vpop.f32.mrb[0].mxu0
  %431 = vdwg.mxu0
  %v432 = vmax.f32 %v427, 0.0
  %v433 = vpack.c.bf16 %v432, %v432
  %v434 = vld [vmem:[%s5] sm:$0xf]
  %v435 = vld [vmem:[%s5 + $0x4] sm:$0xf]
  %v436 = vld [vmem:[%s5 + $0x8] sm:$0xf]
  %v437 = vld [vmem:[%s5 + $0xc] sm:$0xf]
  %v438 = vld [vmem:[%s5 + $0x10] sm:$0xf]
  %v439 = vld [vmem:[%s5 + $0x14] sm:$0xf]
  %v440 = vld [vmem:[%s5 + $0x18] sm:$0xf]
  %v441 = vld [vmem:[%s5 + $0x1c] sm:$0xf]
  %v442 = vld [vmem:[%s5 + $0x20] sm:$0xf]
  %v443 = vld [vmem:[%s5 + $0x24] sm:$0xf]
  %v444 = vld [vmem:[%s5 + $0x28] sm:$0xf]
  %v445 = vld [vmem:[%s5 + $0x2c] sm:$0xf]
  %v446 = vld [vmem:[%s5 + $0x30] sm:$0xf]
  %v447 = vld [vmem:[%s5 + $0x34] sm:$0xf]
  %v448 = vld [vmem:[%s5 + $0x38] sm:$0xf]
  %v449 = vld [vmem:[%s5 + $0x3c] sm:$0xf]
  %v450 = vld [vmem:[%s6] sm:$0x1]
  %v452 = vlaneseq
  %v453 = vshrl.u32 %v452, 7
  %v454 = vsub.s32 0, %v453
  %v455 = vrot.slane %v450, %v454
  %v473 = vunpack.c.l.b16 %v434
  %v474 = vunpack.c.l.b16 %v435
  %v475 = vunpack.c.l.b16 %v436
  %v476 = vunpack.c.l.b16 %v437
  %v477 = vunpack.c.l.b16 %v438
  %v478 = vunpack.c.l.b16 %v439
  %v479 = vunpack.c.l.b16 %v440
  %v480 = vunpack.c.l.b16 %v441
  %v481 = vunpack.c.l.b16 %v442
  %v482 = vunpack.c.l.b16 %v443
  %v483 = vunpack.c.l.b16 %v444
  %v484 = vunpack.c.l.b16 %v445
  %v485 = vunpack.c.l.b16 %v446
  %v486 = vunpack.c.l.b16 %v447
  %v487 = vunpack.c.l.b16 %v448
  %v488 = vunpack.c.l.b16 %v449
  %v489 = vpack.c.b16 %v474, %v473
  %v490 = vpack.c.b16 %v476, %v475
  %v491 = vpack.c.b16 %v478, %v477
  %v492 = vpack.c.b16 %v480, %v479
  %v493 = vpack.c.b16 %v482, %v481
  %v494 = vpack.c.b16 %v484, %v483
  %v495 = vpack.c.b16 %v486, %v485
  %v496 = vpack.c.b16 %v488, %v487
  %505 = vmatprep.subr.bf16.mxu0 0
  %506 = vmatpush1.bf16.msra.mxu0 %v489
  %507 = vmatprep.subr.bf16.mxu0 0
  %508 = vmatpush1.bf16.msra.mxu0 %v490
  %509 = vmatprep.subr.bf16.mxu0 0
  %510 = vmatpush1.bf16.msra.mxu0 %v491
  %511 = vmatprep.subr.bf16.mxu0 0
  %512 = vmatpush1.bf16.msra.mxu0 %v492
  %513 = vmatprep.subr.bf16.mxu0 0
  %514 = vmatpush1.bf16.msra.mxu0 %v493
  %515 = vmatprep.subr.bf16.mxu0 0
  %516 = vmatpush1.bf16.msra.mxu0 %v494
  %517 = vmatprep.subr.bf16.mxu0 0
  %518 = vmatpush1.bf16.msra.mxu0 %v495
  %519 = vmatprep.subr.bf16.mxu0 0
  %520 = vmatpush1.bf16.msra.mxu0 %v496
  %521 = vmatprep.subr.bf16.mxu0 0
  %522 = vmatpush1.bf16.msra.mxu0 0
  %523 = vmatprep.subr.bf16.mxu0 0
  %524 = vmatpush1.bf16.msra.mxu0 0
  %525 = vmatprep.subr.bf16.mxu0 0
  %526 = vmatpush1.bf16.msra.mxu0 0
  %527 = vmatprep.subr.bf16.mxu0 0
  %528 = vmatpush1.bf16.msra.mxu0 0
  %529 = vmatprep.subr.bf16.mxu0 0
  %530 = vmatpush1.bf16.msra.mxu0 0
  %531 = vmatprep.subr.bf16.mxu0 0
  %532 = vmatpush1.bf16.msra.mxu0 0
  %533 = vmatprep.subr.bf16.mxu0 0
  %534 = vmatpush1.bf16.msra.mxu0 0
  %535 = vmatprep.subr.bf16.mxu0 0
  %536 = vmatpush1.bf16.msra.mxu0 0
  %537 = vmatprep.mubr.bf16.mxu0 0
  %538 = vmatmul.mubr.bf16.gmra.mrb[0].mxu0 %v433
  %v539 = vpop.f32.mrb[0].mxu0
  %v540 = vadd.f32 %v455, %v539
  %v541 = vpop.f32.mrb[0].mxu0
  %v542 = vpop.f32.mrb[0].mxu0
  %v543 = vpop.f32.mrb[0].mxu0
  %544 = vdwg.mxu0
  %545 = vst [vmem:[%s7] sm:$0xff] %v540
  // Predicated region
  $region30: #{cnn3d_forward.5} parent=0 // pred_check
    _
  $region31: #{cnn3d_forward.5} parent=0 // pred_check_branch
    %547 = sbr.rel (0) target = $region33
  $region32: #{cnn3d_forward.5} parent=0 // pred_region
    _
  $region33: #{cnn3d_forward.5} parent=0 // pred_fallthru
    _
  // Predicated region
  $region34: #{cnn3d_forward.5} parent=0 // pred_check
    _
  $region35: #{cnn3d_forward.5} parent=0 // pred_check_branch
    %549 = sbr.rel (0) target = $region37
  $region36: #{cnn3d_forward.5} parent=0 // pred_region
    _
  $region37: #{cnn3d_forward.5} parent=0 // pred_fallthru
    _

// kernel: cnn3d_forward.4
$region0: #{cnn3d_forward.4}
  #allocation0 [shape = 'u32[]', space=smem, size = 0x4, offset = 0x4, fixed_abs, tag = 'smem constant byte address 0x4 - core index']
  #allocation1 [shape = 'u32[144,128]{1,0:T(1,128)}', space=vmem, size = 0x12000, scoped, tag = 'internal scratch']
  %s0 = inlined_call_operand.vmem [shape: bf16[16,864], index: 0, kind: input, shape index: {}]
  %s1 = inlined_call_operand.vmem [shape: bf16[864,128], index: 1, kind: input, shape index: {}]
  %s2 = inlined_call_operand.vmem [shape: f32[1,128], index: 2, kind: input, shape index: {}]
  %s3 = inlined_call_operand.vmem [shape: bf16[16,128], index: 3, kind: output, shape index: {}]
  %s4 = sld [smem:[#allocation0]]
  $region22: #{cnn3d_forward.4} parent=0
    _
  %s6 = ssub.s32 1, %s4
  %s7 = scalar_select 0, %s6, %s4
  // Predicated region
  $region2: #{cnn3d_forward.4} parent=0 // pred_check
    _
  $region3: #{cnn3d_forward.4} parent=0 // pred_check_branch
    %9 = sbr.rel (0) target = $region5
  $region4: #{cnn3d_forward.4} parent=0 // pred_region
    _
  $region5: #{cnn3d_forward.4} parent=0 // pred_fallthru
    _
  // Predicated region
  $region6: #{cnn3d_forward.4} parent=0 // pred_check
    _
  $region7: #{cnn3d_forward.4} parent=0 // pred_check_branch
    %11 = sbr.rel (0) target = $region9
  $region8: #{cnn3d_forward.4} parent=0 // pred_region
    _
  $region9: #{cnn3d_forward.4} parent=0 // pred_fallthru
    _
  // Predicated region
  $region10: #{cnn3d_forward.4} parent=0 // pred_check
    _
  $region11: #{cnn3d_forward.4} parent=0 // pred_check_branch
    %13 = sbr.rel (0) target = $region13
  $region12: #{cnn3d_forward.4} parent=0 // pred_region
    _
  $region13: #{cnn3d_forward.4} parent=0 // pred_fallthru
    _
  %v15 = vld [vmem:[%s0] sm:$0xff]
  %v16 = vld [vmem:[%s0 + $0x8] sm:$0xff]
  %v17 = vld [vmem:[%s0 + $0x10] sm:$0xff]
  %v18 = vld [vmem:[%s0 + $0x18] sm:$0xf]
  %v19 = vld [vmem:[%s0 + $0x1c] sm:$0xff]
  %v20 = vld [vmem:[%s0 + $0x24] sm:$0xff]
  %v21 = vld [vmem:[%s0 + $0x2c] sm:$0xff]
  %v22 = vld [vmem:[%s0 + $0x34] sm:$0xf]
  %v23 = vld [vmem:[%s1] sm:$0xf]
  %v24 = vld [vmem:[%s1 + $0x4] sm:$0xf]
  %v25 = vld [vmem:[%s1 + $0x8] sm:$0xf]
  %v26 = vld [vmem:[%s1 + $0xc] sm:$0xf]
  %v27 = vld [vmem:[%s1 + $0x10] sm:$0xf]
  %v28 = vld [vmem:[%s1 + $0x14] sm:$0xf]
  %v29 = vld [vmem:[%s1 + $0x18] sm:$0xf]
  %v30 = vld [vmem:[%s1 + $0x1c] sm:$0xf]
  %v31 = vld [vmem:[%s1 + $0x20] sm:$0xf]
  %v32 = vld [vmem:[%s1 + $0x24] sm:$0xf]
  %v33 = vld [vmem:[%s1 + $0x28] sm:$0xf]
  %v34 = vld [vmem:[%s1 + $0x2c] sm:$0xf]
  %v35 = vld [vmem:[%s1 + $0x30] sm:$0xf]
  %v36 = vld [vmem:[%s1 + $0x34] sm:$0xf]
  %v37 = vld [vmem:[%s1 + $0x38] sm:$0xf]
  %v38 = vld [vmem:[%s1 + $0x3c] sm:$0xf]
  %v39 = vld [vmem:[%s1 + $0x40] sm:$0xf]
  %v40 = vld [vmem:[%s1 + $0x44] sm:$0xf]
  %v41 = vld [vmem:[%s1 + $0x48] sm:$0xf]
  %v42 = vld [vmem:[%s1 + $0x4c] sm:$0xf]
  %v43 = vld [vmem:[%s1 + $0x50] sm:$0xf]
  %v44 = vld [vmem:[%s1 + $0x54] sm:$0xf]
  %v45 = vld [vmem:[%s1 + $0x58] sm:$0xf]
  %v46 = vld [vmem:[%s1 + $0x5c] sm:$0xf]
  %v47 = vld [vmem:[%s1 + $0x60] sm:$0xf]
  %v48 = vld [vmem:[%s1 + $0x64] sm:$0xf]
  %v49 = vld [vmem:[%s1 + $0x68] sm:$0xf]
  %v50 = vld [vmem:[%s1 + $0x6c] sm:$0xf]
  %v51 = vld [vmem:[%s1 + $0x70] sm:$0xf]
  %v52 = vld [vmem:[%s1 + $0x74] sm:$0xf]
  %v53 = vld [vmem:[%s1 + $0x78] sm:$0xf]
  %v54 = vld [vmem:[%s1 + $0x7c] sm:$0xf]
  %v55 = vld [vmem:[%s1 + $0x80] sm:$0xf]
  %v56 = vld [vmem:[%s1 + $0x84] sm:$0xf]
  %v57 = vld [vmem:[%s1 + $0x88] sm:$0xf]
  %v58 = vld [vmem:[%s1 + $0x8c] sm:$0xf]
  %v59 = vld [vmem:[%s1 + $0x90] sm:$0xf]
  %v60 = vld [vmem:[%s1 + $0x94] sm:$0xf]
  %v61 = vld [vmem:[%s1 + $0x98] sm:$0xf]
  %v62 = vld [vmem:[%s1 + $0x9c] sm:$0xf]
  %v63 = vld [vmem:[%s1 + $0xa0] sm:$0xf]
  %v64 = vld [vmem:[%s1 + $0xa4] sm:$0xf]
  %v65 = vld [vmem:[%s1 + $0xa8] sm:$0xf]
  %v66 = vld [vmem:[%s1 + $0xac] sm:$0xf]
  %v67 = vld [vmem:[%s1 + $0xb0] sm:$0xf]
  %v68 = vld [vmem:[%s1 + $0xb4] sm:$0xf]
  %v69 = vld [vmem:[%s1 + $0xb8] sm:$0xf]
  %v70 = vld [vmem:[%s1 + $0xbc] sm:$0xf]
  %v71 = vld [vmem:[%s1 + $0xc0] sm:$0xf]
  %v72 = vld [vmem:[%s1 + $0xc4] sm:$0xf]
  %v73 = vld [vmem:[%s1 + $0xc8] sm:$0xf]
  %v74 = vld [vmem:[%s1 + $0xcc] sm:$0xf]
  %v75 = vld [vmem:[%s1 + $0xd0] sm:$0xf]
  %v76 = vld [vmem:[%s1 + $0xd4] sm:$0xf]
  %v77 = vld [vmem:[%s1 + $0xd8] sm:$0xf]
  %v78 = vld [vmem:[%s1 + $0xdc] sm:$0xf]
  %v79 = vld [vmem:[%s1 + $0xe0] sm:$0xf]
  %v80 = vld [vmem:[%s1 + $0xe4] sm:$0xf]
  %v81 = vld [vmem:[%s1 + $0xe8] sm:$0xf]
  %v82 = vld [vmem:[%s1 + $0xec] sm:$0xf]
  %v83 = vld [vmem:[%s1 + $0xf0] sm:$0xf]
  %v84 = vld [vmem:[%s1 + $0xf4] sm:$0xf]
  %v85 = vld [vmem:[%s1 + $0xf8] sm:$0xf]
  %v86 = vld [vmem:[%s1 + $0xfc] sm:$0xf]
  %v87 = vld [vmem:[%s1 + $0x100] sm:$0xf]
  %v88 = vld [vmem:[%s1 + $0x104] sm:$0xf]
  %v89 = vld [vmem:[%s1 + $0x108] sm:$0xf]
  %v90 = vld [vmem:[%s1 + $0x10c] sm:$0xf]
  %v91 = vld [vmem:[%s1 + $0x110] sm:$0xf]
  %v92 = vld [vmem:[%s1 + $0x114] sm:$0xf]
  %v93 = vld [vmem:[%s1 + $0x118] sm:$0xf]
  %v94 = vld [vmem:[%s1 + $0x11c] sm:$0xf]
  %v95 = vld [vmem:[%s1 + $0x120] sm:$0xf]
  %v96 = vld [vmem:[%s1 + $0x124] sm:$0xf]
  %v97 = vld [vmem:[%s1 + $0x128] sm:$0xf]
  %v98 = vld [vmem:[%s1 + $0x12c] sm:$0xf]
  %v99 = vld [vmem:[%s1 + $0x130] sm:$0xf]
  %v100 = vld [vmem:[%s1 + $0x134] sm:$0xf]
  %v101 = vld [vmem:[%s1 + $0x138] sm:$0xf]
  %v102 = vld [vmem:[%s1 + $0x13c] sm:$0xf]
  %v103 = vld [vmem:[%s1 + $0x140] sm:$0xf]
  %v104 = vld [vmem:[%s1 + $0x144] sm:$0xf]
  %v105 = vld [vmem:[%s1 + $0x148] sm:$0xf]
  %v106 = vld [vmem:[%s1 + $0x14c] sm:$0xf]
  %v107 = vld [vmem:[%s1 + $0x150] sm:$0xf]
  %v108 = vld [vmem:[%s1 + $0x154] sm:$0xf]
  %v109 = vld [vmem:[%s1 + $0x158] sm:$0xf]
  %v110 = vld [vmem:[%s1 + $0x15c] sm:$0xf]
  %v111 = vld [vmem:[%s1 + $0x160] sm:$0xf]
  %v112 = vld [vmem:[%s1 + $0x164] sm:$0xf]
  %v113 = vld [vmem:[%s1 + $0x168] sm:$0xf]
  %v114 = vld [vmem:[%s1 + $0x16c] sm:$0xf]
  %v115 = vld [vmem:[%s1 + $0x170] sm:$0xf]
  %v116 = vld [vmem:[%s1 + $0x174] sm:$0xf]
  %v117 = vld [vmem:[%s1 + $0x178] sm:$0xf]
  %v118 = vld [vmem:[%s1 + $0x17c] sm:$0xf]
  %v119 = vld [vmem:[%s1 + $0x180] sm:$0xf]
  %v120 = vld [vmem:[%s1 + $0x184] sm:$0xf]
  %v121 = vld [vmem:[%s1 + $0x188] sm:$0xf]
  %v122 = vld [vmem:[%s1 + $0x18c] sm:$0xf]
  %v123 = vld [vmem:[%s1 + $0x190] sm:$0xf]
  %v124 = vld [vmem:[%s1 + $0x194] sm:$0xf]
  %v125 = vld [vmem:[%s1 + $0x198] sm:$0xf]
  %v126 = vld [vmem:[%s1 + $0x19c] sm:$0xf]
  %v127 = vld [vmem:[%s1 + $0x1a0] sm:$0xf]
  %v128 = vld [vmem:[%s1 + $0x1a4] sm:$0xf]
  %v129 = vld [vmem:[%s1 + $0x1a8] sm:$0xf]
  %v130 = vld [vmem:[%s1 + $0x1ac] sm:$0xf]
  %v131 = vld [vmem:[%s2] sm:$0x1]
  %v133 = vlaneseq
  %v134 = vshrl.u32 %v133, 7
  %v135 = vsub.s32 0, %v134
  %v136 = vrot.slane %v131, %v135
  %v146 = vunpack.c.l.b16 %v15
  %v147 = vunpack.c.h.b16 %v15
  %v148 = vunpack.c.l.b16 %v16
  %v149 = vunpack.c.h.b16 %v16
  %v150 = vunpack.c.l.b16 %v17
  %v151 = vunpack.c.h.b16 %v17
  %v152 = vunpack.c.l.b16 %v18
  %v153 = vunpack.c.l.b16 %v19
  %v154 = vunpack.c.h.b16 %v19
  %v155 = vunpack.c.l.b16 %v20
  %v156 = vunpack.c.h.b16 %v20
  %v157 = vunpack.c.l.b16 %v21
  %v158 = vunpack.c.h.b16 %v21
  %v159 = vunpack.c.l.b16 %v22
  %v160 = vpack.c.b16 %v153, %v146
  %v161 = vpack.c.b16 %v154, %v147
  %v162 = vpack.c.b16 %v155, %v148
  %v163 = vpack.c.b16 %v156, %v149
  %v164 = vpack.c.b16 %v157, %v150
  %v165 = vpack.c.b16 %v158, %v151
  %v166 = vpack.c.b16 %v159, %v152
  %v281 = vunpack.c.l.b16 %v23
  %v282 = vunpack.c.l.b16 %v24
  %v283 = vunpack.c.l.b16 %v25
  %v284 = vunpack.c.l.b16 %v26
  %v285 = vunpack.c.l.b16 %v27
  %v286 = vunpack.c.l.b16 %v28
  %v287 = vunpack.c.l.b16 %v29
  %v288 = vunpack.c.l.b16 %v30
  %v289 = vunpack.c.l.b16 %v31
  %v290 = vunpack.c.l.b16 %v32
  %v291 = vunpack.c.l.b16 %v33
  %v292 = vunpack.c.l.b16 %v34
  %v293 = vunpack.c.l.b16 %v35
  %v294 = vunpack.c.l.b16 %v36
  %v295 = vunpack.c.l.b16 %v37
  %v296 = vunpack.c.l.b16 %v38
  %v297 = vunpack.c.l.b16 %v39
  %v298 = vunpack.c.l.b16 %v40
  %v299 = vunpack.c.l.b16 %v41
  %v300 = vunpack.c.l.b16 %v42
  %v301 = vunpack.c.l.b16 %v43
  %v302 = vunpack.c.l.b16 %v44
  %v303 = vunpack.c.l.b16 %v45
  %v304 = vunpack.c.l.b16 %v46
  %v305 = vunpack.c.l.b16 %v47
  %v306 = vunpack.c.l.b16 %v48
  %v307 = vunpack.c.l.b16 %v49
  %v308 = vunpack.c.l.b16 %v50
  %v309 = vunpack.c.l.b16 %v51
  %v310 = vunpack.c.l.b16 %v52
  %v311 = vunpack.c.l.b16 %v53
  %v312 = vunpack.c.l.b16 %v54
  %v313 = vunpack.c.l.b16 %v55
  %v314 = vunpack.c.l.b16 %v56
  %v315 = vunpack.c.l.b16 %v57
  %v316 = vunpack.c.l.b16 %v58
  %v317 = vunpack.c.l.b16 %v59
  %v318 = vunpack.c.l.b16 %v60
  %v319 = vunpack.c.l.b16 %v61
  %v320 = vunpack.c.l.b16 %v62
  %v321 = vunpack.c.l.b16 %v63
  %v322 = vunpack.c.l.b16 %v64
  %v323 = vunpack.c.l.b16 %v65
  %v324 = vunpack.c.l.b16 %v66
  %v325 = vunpack.c.l.b16 %v67
  %v326 = vunpack.c.l.b16 %v68
  %v327 = vunpack.c.l.b16 %v69
  %v328 = vunpack.c.l.b16 %v70
  %v329 = vunpack.c.l.b16 %v71
  %v330 = vunpack.c.l.b16 %v72
  %v331 = vunpack.c.l.b16 %v73
  %v332 = vunpack.c.l.b16 %v74
  %v333 = vunpack.c.l.b16 %v75
  %v334 = vunpack.c.l.b16 %v76
  %v335 = vunpack.c.l.b16 %v77
  %v336 = vunpack.c.l.b16 %v78
  %v337 = vunpack.c.l.b16 %v79
  %v338 = vunpack.c.l.b16 %v80
  %v339 = vunpack.c.l.b16 %v81
  %v340 = vunpack.c.l.b16 %v82
  %v341 = vunpack.c.l.b16 %v83
  %v342 = vunpack.c.l.b16 %v84
  %v343 = vunpack.c.l.b16 %v85
  %v344 = vunpack.c.l.b16 %v86
  %v345 = vunpack.c.l.b16 %v87
  %v346 = vunpack.c.l.b16 %v88
  %v347 = vunpack.c.l.b16 %v89
  %v348 = vunpack.c.l.b16 %v90
  %v349 = vunpack.c.l.b16 %v91
  %v350 = vunpack.c.l.b16 %v92
  %v351 = vunpack.c.l.b16 %v93
  %v352 = vunpack.c.l.b16 %v94
  %v353 = vunpack.c.l.b16 %v95
  %v354 = vunpack.c.l.b16 %v96
  %v355 = vunpack.c.l.b16 %v97
  %v356 = vunpack.c.l.b16 %v98
  %v357 = vunpack.c.l.b16 %v99
  %v358 = vunpack.c.l.b16 %v100
  %v359 = vunpack.c.l.b16 %v101
  %v360 = vunpack.c.l.b16 %v102
  %v361 = vunpack.c.l.b16 %v103
  %v362 = vunpack.c.l.b16 %v104
  %v363 = vunpack.c.l.b16 %v105
  %v364 = vunpack.c.l.b16 %v106
  %v365 = vunpack.c.l.b16 %v107
  %v366 = vunpack.c.l.b16 %v108
  %v367 = vunpack.c.l.b16 %v109
  %v368 = vunpack.c.l.b16 %v110
  %v369 = vunpack.c.l.b16 %v111
  %v370 = vunpack.c.l.b16 %v112
  %v371 = vunpack.c.l.b16 %v113
  %v372 = vunpack.c.l.b16 %v114
  %v373 = vunpack.c.l.b16 %v115
  %v374 = vunpack.c.l.b16 %v116
  %v375 = vunpack.c.l.b16 %v117
  %v376 = vunpack.c.l.b16 %v118
  %v377 = vunpack.c.l.b16 %v119
  %v378 = vunpack.c.l.b16 %v120
  %v379 = vunpack.c.l.b16 %v121
  %v380 = vunpack.c.l.b16 %v122
  %v381 = vunpack.c.l.b16 %v123
  %v382 = vunpack.c.l.b16 %v124
  %v383 = vunpack.c.l.b16 %v125
  %v384 = vunpack.c.l.b16 %v126
  %v385 = vunpack.c.l.b16 %v127
  %v386 = vunpack.c.l.b16 %v128
  %v387 = vunpack.c.l.b16 %v129
  %v388 = vunpack.c.l.b16 %v130
  %v389 = vpack.c.b16 %v282, %v281
  %v390 = vpack.c.b16 %v284, %v283
  %v391 = vpack.c.b16 %v286, %v285
  %v392 = vpack.c.b16 %v288, %v287
  %v393 = vpack.c.b16 %v290, %v289
  %v394 = vpack.c.b16 %v292, %v291
  %v395 = vpack.c.b16 %v294, %v293
  %v396 = vpack.c.b16 %v296, %v295
  %v397 = vpack.c.b16 %v298, %v297
  %v398 = vpack.c.b16 %v300, %v299
  %v399 = vpack.c.b16 %v302, %v301
  %v400 = vpack.c.b16 %v304, %v303
  %v401 = vpack.c.b16 %v306, %v305
  %v402 = vpack.c.b16 %v308, %v307
  %v403 = vpack.c.b16 %v310, %v309
  %v404 = vpack.c.b16 %v312, %v311
  %v405 = vpack.c.b16 %v314, %v313
  %v406 = vpack.c.b16 %v316, %v315
  %v407 = vpack.c.b16 %v318, %v317
  %v408 = vpack.c.b16 %v320, %v319
  %v409 = vpack.c.b16 %v322, %v321
  %v410 = vpack.c.b16 %v324, %v323
  %v411 = vpack.c.b16 %v326, %v325
  %v412 = vpack.c.b16 %v328, %v327
  %v413 = vpack.c.b16 %v330, %v329
  %v414 = vpack.c.b16 %v332, %v331
  %v415 = vpack.c.b16 %v334, %v333
  %v416 = vpack.c.b16 %v336, %v335
  %v417 = vpack.c.b16 %v338, %v337
  %v418 = vpack.c.b16 %v340, %v339
  %v419 = vpack.c.b16 %v342, %v341
  %v420 = vpack.c.b16 %v344, %v343
  %v421 = vpack.c.b16 %v346, %v345
  %v422 = vpack.c.b16 %v348, %v347
  %v423 = vpack.c.b16 %v350, %v349
  %v424 = vpack.c.b16 %v352, %v351
  %v425 = vpack.c.b16 %v354, %v353
  %v426 = vpack.c.b16 %v356, %v355
  %v427 = vpack.c.b16 %v358, %v357
  %v428 = vpack.c.b16 %v360, %v359
  %v429 = vpack.c.b16 %v362, %v361
  %v430 = vpack.c.b16 %v364, %v363
  %v431 = vpack.c.b16 %v366, %v365
  %v432 = vpack.c.b16 %v368, %v367
  %v433 = vpack.c.b16 %v370, %v369
  %v434 = vpack.c.b16 %v372, %v371
  %v435 = vpack.c.b16 %v374, %v373
  %v436 = vpack.c.b16 %v376, %v375
  %v437 = vpack.c.b16 %v378, %v377
  %v438 = vpack.c.b16 %v380, %v379
  %v439 = vpack.c.b16 %v382, %v381
  %v440 = vpack.c.b16 %v384, %v383
  %v441 = vpack.c.b16 %v386, %v385
  %v442 = vpack.c.b16 %v388, %v387
  %vm497 = vcmask 785408
  %v499 = vsel %vm497, %v166, 0
  %501 = vmatprep.subr.bf16.mxu0 0
  %502 = vmatpush1.bf16.msra.mxu0 %v389
  %503 = vmatprep.subr.bf16.mxu0 0
  %504 = vmatpush1.bf16.msra.mxu0 %v390
  %505 = vmatprep.subr.bf16.mxu0 0
  %506 = vmatpush1.bf16.msra.mxu0 %v391
  %507 = vmatprep.subr.bf16.mxu0 0
  %508 = vmatpush1.bf16.msra.mxu0 %v392
  %509 = vmatprep.subr.bf16.mxu0 0
  %510 = vmatpush1.bf16.msra.mxu0 %v393
  %511 = vmatprep.subr.bf16.mxu0 0
  %512 = vmatpush1.bf16.msra.mxu0 %v394
  %513 = vmatprep.subr.bf16.mxu0 0
  %514 = vmatpush1.bf16.msra.mxu0 %v395
  %515 = vmatprep.subr.bf16.mxu0 0
  %516 = vmatpush1.bf16.msra.mxu0 %v396
  %517 = vmatprep.subr.bf16.mxu0 0
  %518 = vmatpush1.bf16.msra.mxu0 %v397
  %519 = vmatprep.subr.bf16.mxu0 0
  %520 = vmatpush1.bf16.msra.mxu0 %v398
  %521 = vmatprep.subr.bf16.mxu0 0
  %522 = vmatpush1.bf16.msra.mxu0 %v399
  %523 = vmatprep.subr.bf16.mxu0 0
  %524 = vmatpush1.bf16.msra.mxu0 %v400
  %525 = vmatprep.subr.bf16.mxu0 0
  %526 = vmatpush1.bf16.msra.mxu0 %v401
  %527 = vmatprep.subr.bf16.mxu0 0
  %528 = vmatpush1.bf16.msra.mxu0 %v402
  %529 = vmatprep.subr.bf16.mxu0 0
  %530 = vmatpush1.bf16.msra.mxu0 %v403
  %531 = vmatprep.subr.bf16.mxu0 0
  %532 = vmatpush1.bf16.msra.mxu0 %v404
  %533 = vmatprep.mubr.bf16.mxu0 %v161
  %534 = vmatmul.mubr.bf16.gmra.mrb[0].mxu0 %v160
  %v535 = vpop.f32.mrb[0].mxu0
  %v536 = vadd.f32 %v136, %v535
  %v537 = vpop.f32.mrb[0].mxu0
  %v538 = vpop.f32.mrb[0].mxu0
  %v539 = vadd.f32 %v136, %v538
  %v540 = vpop.f32.mrb[0].mxu0
  %541 = vdwg.mxu0
  %542 = vmatprep.subr.bf16.mxu0 0
  %543 = vmatpush1.bf16.msra.mxu0 %v405
  %544 = vmatprep.subr.bf16.mxu0 0
  %545 = vmatpush1.bf16.msra.mxu0 %v406
  %546 = vmatprep.subr.bf16.mxu0 0
  %547 = vmatpush1.bf16.msra.mxu0 %v407
  %548 = vmatprep.subr.bf16.mxu0 0
  %549 = vmatpush1.bf16.msra.mxu0 %v408
  %550 = vmatprep.subr.bf16.mxu0 0
  %551 = vmatpush1.bf16.msra.mxu0 %v409
  %552 = vmatprep.subr.bf16.mxu0 0
  %553 = vmatpush1.bf16.msra.mxu0 %v410
  %554 = vmatprep.subr.bf16.mxu0 0
  %555 = vmatpush1.bf16.msra.mxu0 %v411
  %556 = vmatprep.subr.bf16.mxu0 0
  %557 = vmatpush1.bf16.msra.mxu0 %v412
  %558 = vmatprep.subr.bf16.mxu0 0
  %559 = vmatpush1.bf16.msra.mxu0 %v413
  %560 = vmatprep.subr.bf16.mxu0 0
  %561 = vmatpush1.bf16.msra.mxu0 %v414
  %562 = vmatprep.subr.bf16.mxu0 0
  %563 = vmatpush1.bf16.msra.mxu0 %v415
  %564 = vmatprep.subr.bf16.mxu0 0
  %565 = vmatpush1.bf16.msra.mxu0 %v416
  %566 = vmatprep.subr.bf16.mxu0 0
  %567 = vmatpush1.bf16.msra.mxu0 %v417
  %568 = vmatprep.subr.bf16.mxu0 0
  %569 = vmatpush1.bf16.msra.mxu0 %v418
  %570 = vmatprep.subr.bf16.mxu0 0
  %571 = vmatpush1.bf16.msra.mxu0 %v419
  %572 = vmatprep.subr.bf16.mxu0 0
  %573 = vmatpush1.bf16.msra.mxu0 %v420
  %574 = vmatprep.mubr.bf16.mxu0 %v163
  %575 = vmatmul.mubr.bf16.gmra.mrb[0].mxu0 %v162
  %v576 = vpop.f32.mrb[0].mxu0
  %v577 = vadd.f32 %v536, %v576
  %v578 = vpop.f32.mrb[0].mxu0
  %v579 = vpop.f32.mrb[0].mxu0
  %v580 = vadd.f32 %v539, %v579
  %v581 = vpop.f32.mrb[0].mxu0
  %582 = vdwg.mxu0
  %583 = vmatprep.subr.bf16.mxu0 0
  %584 = vmatpush1.bf16.msra.mxu0 %v421
  %585 = vmatprep.subr.bf16.mxu0 0
  %586 = vmatpush1.bf16.msra.mxu0 %v422
  %587 = vmatprep.subr.bf16.mxu0 0
  %588 = vmatpush1.bf16.msra.mxu0 %v423
  %589 = vmatprep.subr.bf16.mxu0 0
  %590 = vmatpush1.bf16.msra.mxu0 %v424
  %591 = vmatprep.subr.bf16.mxu0 0
  %592 = vmatpush1.bf16.msra.mxu0 %v425
  %593 = vmatprep.subr.bf16.mxu0 0
  %594 = vmatpush1.bf16.msra.mxu0 %v426
  %595 = vmatprep.subr.bf16.mxu0 0
  %596 = vmatpush1.bf16.msra.mxu0 %v427
  %597 = vmatprep.subr.bf16.mxu0 0
  %598 = vmatpush1.bf16.msra.mxu0 %v428
  %599 = vmatprep.subr.bf16.mxu0 0
  %600 = vmatpush1.bf16.msra.mxu0 %v429
  %601 = vmatprep.subr.bf16.mxu0 0
  %602 = vmatpush1.bf16.msra.mxu0 %v430
  %603 = vmatprep.subr.bf16.mxu0 0
  %604 = vmatpush1.bf16.msra.mxu0 %v431
  %605 = vmatprep.subr.bf16.mxu0 0
  %606 = vmatpush1.bf16.msra.mxu0 %v432
  %607 = vmatprep.subr.bf16.mxu0 0
  %608 = vmatpush1.bf16.msra.mxu0 %v433
  %609 = vmatprep.subr.bf16.mxu0 0
  %610 = vmatpush1.bf16.msra.mxu0 %v434
  %611 = vmatprep.subr.bf16.mxu0 0
  %612 = vmatpush1.bf16.msra.mxu0 %v435
  %613 = vmatprep.subr.bf16.mxu0 0
  %614 = vmatpush1.bf16.msra.mxu0 %v436
  %615 = vmatprep.mubr.bf16.mxu0 %v165
  %616 = vmatmul.mubr.bf16.gmra.mrb[0].mxu0 %v164
  %v617 = vpop.f32.mrb[0].mxu0
  %v618 = vadd.f32 %v577, %v617
  %v619 = vpop.f32.mrb[0].mxu0
  %v620 = vpop.f32.mrb[0].mxu0
  %v621 = vadd.f32 %v580, %v620
  %v622 = vpop.f32.mrb[0].mxu0
  %623 = vdwg.mxu0
  %624 = vmatprep.subr.bf16.mxu0 0
  %625 = vmatpush1.bf16.msra.mxu0 %v437
  %626 = vmatprep.subr.bf16.mxu0 0
  %627 = vmatpush1.bf16.msra.mxu0 %v438
  %628 = vmatprep.subr.bf16.mxu0 0
  %629 = vmatpush1.bf16.msra.mxu0 %v439
  %630 = vmatprep.subr.bf16.mxu0 0
  %631 = vmatpush1.bf16.msra.mxu0 %v440
  %632 = vmatprep.subr.bf16.mxu0 0
  %633 = vmatpush1.bf16.msra.mxu0 %v441
  %634 = vmatprep.subr.bf16.mxu0 0
  %635 = vmatpush1.bf16.msra.mxu0 %v442
  %636 = vmatprep.subr.bf16.mxu0 0
  %637 = vmatpush1.bf16.msra.mxu0 0
  %638 = vmatprep.subr.bf16.mxu0 0
  %639 = vmatpush1.bf16.msra.mxu0 0
  %640 = vmatprep.subr.bf16.mxu0 0
  %641 = vmatpush1.bf16.msra.mxu0 0
  %642 = vmatprep.subr.bf16.mxu0 0
  %643 = vmatpush1.bf16.msra.mxu0 0
  %644 = vmatprep.subr.bf16.mxu0 0
  %645 = vmatpush1.bf16.msra.mxu0 0
  %646 = vmatprep.subr.bf16.mxu0 0
  %647 = vmatpush1.bf16.msra.mxu0 0
  %648 = vmatprep.subr.bf16.mxu0 0
  %649 = vmatpush1.bf16.msra.mxu0 0
  %650 = vmatprep.subr.bf16.mxu0 0
  %651 = vmatpush1.bf16.msra.mxu0 0
  %652 = vmatprep.subr.bf16.mxu0 0
  %653 = vmatpush1.bf16.msra.mxu0 0
  %654 = vmatprep.subr.bf16.mxu0 0
  %655 = vmatpush1.bf16.msra.mxu0 0
  %656 = vmatprep.mubr.bf16.mxu0 0
  %657 = vmatmul.mubr.bf16.gmra.mrb[0].mxu0 %v499
  %v658 = vpop.f32.mrb[0].mxu0
  %v659 = vadd.f32 %v618, %v658
  %v660 = vpop.f32.mrb[0].mxu0
  %v661 = vpop.f32.mrb[0].mxu0
  %v662 = vadd.f32 %v621, %v661
  %v663 = vpop.f32.mrb[0].mxu0
  %664 = vdwg.mxu0
  %v665 = vmax.f32 %v659, 0.0
  %v666 = vmax.f32 %v662, 0.0
  %v667 = vpack.c.bf16 %v666, %v665
  %v669 = vunpack.c.l.b16 %v667
  %v670 = vunpack.c.h.b16 %v667
  %v671 = vpack.c.b16 %v669, %v669
  %v672 = vpack.c.b16 %v670, %v670
  %675 = vst [vmem:[%s3] sm:$0xf] %v671
  %676 = vst [vmem:[%s3 + $0x4] sm:$0xf] %v672
  // Predicated region
  $region14: #{cnn3d_forward.4} parent=0 // pred_check
    _
  $region15: #{cnn3d_forward.4} parent=0 // pred_check_branch
    %678 = sbr.rel (0) target = $region17
  $region16: #{cnn3d_forward.4} parent=0 // pred_region
    _
  $region17: #{cnn3d_forward.4} parent=0 // pred_fallthru
    _
  // Predicated region
  $region18: #{cnn3d_forward.4} parent=0 // pred_check
    _
  $region19: #{cnn3d_forward.4} parent=0 // pred_check_branch
    %680 = sbr.rel (0) target = $region21
  $region20: #{cnn3d_forward.4} parent=0 // pred_region
    _
  $region21: #{cnn3d_forward.4} parent=0 // pred_fallthru
    _

</llo_original>
